<compile_context>
chip_gen: v7x
topology: tpu7x:2x2x1
jax: 0.10.0
libtpu: 0.0.40
codegen_flags: <defaults>
</compile_context>

<pallas_src>
import jax
import jax.numpy as jnp
from jax.experimental import pallas as pl
from jax.experimental.pallas import tpu as pltpu

FEAT_IN = 5
H1, H2, OUT = 500, 100, 2          # logical (PyTorch) feature sizes
H1P, H2P = 512, 128                # padded hidden sizes (tile multiples)
OUTP_LHS = 128                     # w3^T rows padded to a full MXU tile
OUTP_SUB = 8                       # output sublanes stored (logits in rows 0:2)
LANE = 128
TB_MAX = 1024                      # batch-lane tile (review: 256 -> 1024)


def mlp_kernel(x_ref, w1_ref, b1_ref, w2_ref, b2_ref, w3_ref, b3_ref, o_ref):
    """Batch-on-lanes MLP step: activations are (features, TB)."""
    # ---- Layer 1: K=5 -> 5 VPU rank-1 outer-product FMAs (MXU would be wasted)
    x = x_ref[...]                                    # (5,   TB) f32
    w1 = w1_ref[...]                                  # (H1P, 5)  f32
    h1 = w1[:, 0:1] * x[0:1, :]                       # (H1P, TB)
    for k in range(1, FEAT_IN):                       # static unroll, K = 5
        h1 = h1 + w1[:, k:k + 1] * x[k:k + 1, :]
    h1 = jax.nn.sigmoid(h1 + b1_ref[...])             # bias (H1P,1) -> lane bcast

    # ---- Layer 2: (128,512) @ (512,TB) on the MXU, bf16 in / f32 accumulate.
    # Padded cols (500:512) of w2^T are zero -> padded h1 rows (=0.5) drop out.
    h2 = jnp.dot(w2_ref[...], h1.astype(jnp.bfloat16),
                 preferred_element_type=jnp.float32)   # (H2P, TB)
    h2 = jax.nn.sigmoid(h2 + b2_ref[...])

    # ---- Layer 3: (128,128) @ (128,TB) on the MXU; store first 8 sublanes only
    # (lane-dense (8,TB) tile; real logits are rows 0:2).
    out = jnp.dot(w3_ref[...], h2.astype(jnp.bfloat16),
                  preferred_element_type=jnp.float32)  # (128, TB)
    o_ref[...] = (out[:OUTP_SUB, :] + b3_ref[...]).astype(o_ref.dtype)


def _round_up(a, m):
    return (a + m - 1) // m * m


def _pad2(a, rows, cols):
    return jnp.pad(a, ((0, rows - a.shape[0]), (0, cols - a.shape[1])))


@jax.jit
def classifier_forward(x, params):
    w1, b1, w2, b2, w3, b3 = params
    B = x.shape[0]

    # --- Batch tiling: batch rides the lane axis, so tiles are multiples of 128.
    Bp = _round_up(max(B, 1), LANE)
    if Bp <= LANE:
        TB = Bp                                   # single step: tiny batch is launch-bound
    else:
        # >= 2 grid steps so the 'parallel' axis can shard over v7x's 2 TensorCores,
        # capped at TB_MAX=1024 (fits every generation's default scoped VMEM).
        TB = min(TB_MAX, _round_up(-(-Bp // 2), LANE))
        Bp = _round_up(Bp, TB)

    # --- Transposed, zero-padded parameters (padded rows/cols are zero -> exact).
    xt = jnp.pad(x, ((0, Bp - B), (0, 0))).T                    # (5,   Bp) f32
    w1t = _pad2(w1.T, H1P, FEAT_IN)                             # (512, 5)  f32 (VPU layer)
    b1t = _pad2(b1.T, H1P, 1)                                   # (512, 1)  f32
    w2t = _pad2(w2.T, H2P, H1P).astype(jnp.bfloat16)            # (128, 512) bf16 (MXU)
    b2t = _pad2(b2.T, H2P, 1)                                   # (128, 1)  f32
    w3t = _pad2(w3.T, OUTP_LHS, H2P).astype(jnp.bfloat16)       # (128, 128) bf16 (MXU)
    b3t = _pad2(b3.T, OUTP_SUB, 1)                              # (8,   1)  f32

    # Weights/biases: full-array blocks with a constant index_map -> stay
    # VMEM-resident across all batch-grid iterations (no per-step weight DMA).
    const = lambda shape: pl.BlockSpec(shape, lambda i: (0, 0))

    out = pl.pallas_call(
        mlp_kernel,
        out_shape=jax.ShapeDtypeStruct((OUTP_SUB, Bp), jnp.float32),
        grid=(Bp // TB,),
        in_specs=[
            pl.BlockSpec((FEAT_IN, TB), lambda i: (0, i)),      # x^T batch tile
            const((H1P, FEAT_IN)), const((H1P, 1)),
            const((H2P, H1P)),     const((H2P, 1)),
            const((OUTP_LHS, H2P)), const((OUTP_SUB, 1)),
        ],
        out_specs=pl.BlockSpec((OUTP_SUB, TB), lambda i: (0, i)),
        compiler_params=pltpu.CompilerParams(
            dimension_semantics=("parallel",)),
    )(xt, w1t, b1t, w2t, b2t, w3t, b3t)

    # Lane-dense (8, Bp) logits slab -> (B, 2).
    return out[:OUT, :B].T


def init_params(key):
    """Deterministic init mimicking PyTorch nn.Linear default U(-1/sqrt(fan_in), +).
    Stored as (in, out) / (1, out) so the math is y = x @ W + b."""
    dims = [(FEAT_IN, H1), (H1, H2), (H2, OUT)]
    params = []
    for fan_in, fan_out in dims:
        kw, kb, key = jax.random.split(key, 3)
        bound = 1.0 / jnp.sqrt(fan_in)
        w = jax.random.uniform(kw, (fan_in, fan_out), jnp.float32, -bound, bound)
        b = jax.random.uniform(kb, (1, fan_out), jnp.float32, -bound, bound)
        params += [w, b]
    return tuple(params)


def reference_forward(x, params):
    w1, b1, w2, b2, w3, b3 = params
    h1 = jax.nn.sigmoid(x @ w1 + b1)
    h2 = jax.nn.sigmoid(h1 @ w2 + b2)
    return h2 @ w3 + b3


if __name__ == "__main__":
    key = jax.random.PRNGKey(0)
    kx, kp = jax.random.split(key)

    batch = 8
    x = jax.random.normal(kx, (batch, FEAT_IN), jnp.float32)
    params = init_params(kp)

    out = classifier_forward(x, params)
    jax.block_until_ready(out)

    ref = reference_forward(x, params)
    assert out.shape == (batch, OUT), out.shape
    # bf16 MXU operands (f32 accumulation) -> loosened tolerance vs f32 reference.
    assert jnp.allclose(out, ref, atol=2e-2, rtol=2e-2), "mismatch vs reference"

    print("KERNEL_OK")
</pallas_src>

<mosaic_0001>
module attributes {stable_mosaic.version = 11 : i64} {
  func.func @mlp_kernel(%arg0: i32, %arg1: memref<5x128xf32, #tpu.memory_space<vmem>>, %arg2: memref<512x5xf32, #tpu.memory_space<vmem>>, %arg3: memref<512x1xf32, #tpu.memory_space<vmem>>, %arg4: memref<128x512xbf16, #tpu.memory_space<vmem>>, %arg5: memref<128x1xf32, #tpu.memory_space<vmem>>, %arg6: memref<128x128xbf16, #tpu.memory_space<vmem>>, %arg7: memref<8x1xf32, #tpu.memory_space<vmem>>, %arg8: memref<8x128xf32, #tpu.memory_space<vmem>>) attributes {dimension_semantics = [#tpu.dimension_semantics<parallel>], iteration_bounds = array<i64: 1>, scalar_prefetch = 0 : i64, scratch_operands = 0 : i64, tpu.core_type = #tpu.core_type<tc>, window_params = [{transform_indices = @transform_0, window_bounds = array<i64: 5, 128>}, {pipeline_mode = #tpu.pipeline_mode<synchronous>, transform_indices = @transform_1, window_bounds = array<i64: 512, 5>}, {pipeline_mode = #tpu.pipeline_mode<synchronous>, transform_indices = @transform_2, window_bounds = array<i64: 512, 1>}, {pipeline_mode = #tpu.pipeline_mode<synchronous>, transform_indices = @transform_3, window_bounds = array<i64: 128, 512>}, {pipeline_mode = #tpu.pipeline_mode<synchronous>, transform_indices = @transform_4, window_bounds = array<i64: 128, 1>}, {pipeline_mode = #tpu.pipeline_mode<synchronous>, transform_indices = @transform_5, window_bounds = array<i64: 128, 128>}, {pipeline_mode = #tpu.pipeline_mode<synchronous>, transform_indices = @transform_6, window_bounds = array<i64: 8, 1>}, {transform_indices = @transform_7, window_bounds = array<i64: 8, 128>}]} {
    %c0 = arith.constant 0 : index
    %c0_0 = arith.constant 0 : index
    %0 = vector.load %arg1[%c0, %c0_0] : memref<5x128xf32, #tpu.memory_space<vmem>>, vector<5x128xf32>
    %c0_1 = arith.constant 0 : index
    %c0_2 = arith.constant 0 : index
    %1 = vector.load %arg2[%c0_1, %c0_2] : memref<512x5xf32, #tpu.memory_space<vmem>>, vector<512x5xf32>
    %2 = vector.extract_strided_slice %1 {offsets = [0, 0], sizes = [512, 1], strides = [1, 1]} : vector<512x5xf32> to vector<512x1xf32>
    %3 = vector.extract_strided_slice %0 {offsets = [0, 0], sizes = [1, 128], strides = [1, 1]} : vector<5x128xf32> to vector<1x128xf32>
    %4 = vector.broadcast %2 : vector<512x1xf32> to vector<512x128xf32>
    %5 = vector.broadcast %3 : vector<1x128xf32> to vector<512x128xf32>
    %6 = arith.mulf %4, %5 : vector<512x128xf32>
    %7 = vector.extract_strided_slice %1 {offsets = [0, 1], sizes = [512, 1], strides = [1, 1]} : vector<512x5xf32> to vector<512x1xf32>
    %8 = vector.extract_strided_slice %0 {offsets = [1, 0], sizes = [1, 128], strides = [1, 1]} : vector<5x128xf32> to vector<1x128xf32>
    %9 = vector.broadcast %7 : vector<512x1xf32> to vector<512x128xf32>
    %10 = vector.broadcast %8 : vector<1x128xf32> to vector<512x128xf32>
    %11 = arith.mulf %9, %10 : vector<512x128xf32>
    %12 = arith.addf %6, %11 : vector<512x128xf32>
    %13 = vector.extract_strided_slice %1 {offsets = [0, 2], sizes = [512, 1], strides = [1, 1]} : vector<512x5xf32> to vector<512x1xf32>
    %14 = vector.extract_strided_slice %0 {offsets = [2, 0], sizes = [1, 128], strides = [1, 1]} : vector<5x128xf32> to vector<1x128xf32>
    %15 = vector.broadcast %13 : vector<512x1xf32> to vector<512x128xf32>
    %16 = vector.broadcast %14 : vector<1x128xf32> to vector<512x128xf32>
    %17 = arith.mulf %15, %16 : vector<512x128xf32>
    %18 = arith.addf %12, %17 : vector<512x128xf32>
    %19 = vector.extract_strided_slice %1 {offsets = [0, 3], sizes = [512, 1], strides = [1, 1]} : vector<512x5xf32> to vector<512x1xf32>
    %20 = vector.extract_strided_slice %0 {offsets = [3, 0], sizes = [1, 128], strides = [1, 1]} : vector<5x128xf32> to vector<1x128xf32>
    %21 = vector.broadcast %19 : vector<512x1xf32> to vector<512x128xf32>
    %22 = vector.broadcast %20 : vector<1x128xf32> to vector<512x128xf32>
    %23 = arith.mulf %21, %22 : vector<512x128xf32>
    %24 = arith.addf %18, %23 : vector<512x128xf32>
    %25 = vector.extract_strided_slice %1 {offsets = [0, 4], sizes = [512, 1], strides = [1, 1]} : vector<512x5xf32> to vector<512x1xf32>
    %26 = vector.extract_strided_slice %0 {offsets = [4, 0], sizes = [1, 128], strides = [1, 1]} : vector<5x128xf32> to vector<1x128xf32>
    %27 = vector.broadcast %25 : vector<512x1xf32> to vector<512x128xf32>
    %28 = vector.broadcast %26 : vector<1x128xf32> to vector<512x128xf32>
    %29 = arith.mulf %27, %28 : vector<512x128xf32>
    %30 = arith.addf %24, %29 : vector<512x128xf32>
    %c0_3 = arith.constant 0 : index
    %c0_4 = arith.constant 0 : index
    %31 = vector.load %arg3[%c0_3, %c0_4] : memref<512x1xf32, #tpu.memory_space<vmem>>, vector<512x1xf32>
    %32 = vector.broadcast %31 : vector<512x1xf32> to vector<512x128xf32>
    %33 = arith.addf %30, %32 : vector<512x128xf32>
    %34 = arith.negf %33 : vector<512x128xf32>
    %35 = math.exp %34 : vector<512x128xf32>
    %cst = arith.constant 1.000000e+00 : f32
    %36 = vector.broadcast %cst : f32 to vector<512x128xf32>
    %37 = arith.addf %36, %35 : vector<512x128xf32>
    %38 = arith.divf %36, %37 : vector<512x128xf32>
    %c0_5 = arith.constant 0 : index
    %c0_6 = arith.constant 0 : index
    %39 = vector.load %arg4[%c0_5, %c0_6] : memref<128x512xbf16, #tpu.memory_space<vmem>>, vector<128x512xbf16>
    %40 = arith.truncf %38 : vector<512x128xf32> to vector<512x128xbf16>
    %cst_7 = arith.constant dense<0.000000e+00> : vector<128x128xf32>
    %41 = tpu.matmul %39, %40, %cst_7 {dimension_numbers = #tpu.dot_dimension_numbers<[1], [0], [0], [1], [0, 0, 1, 1], [], []>} : vector<128x512xbf16>, vector<512x128xbf16>, vector<128x128xf32> -> vector<128x128xf32>
    %c0_8 = arith.constant 0 : index
    %c0_9 = arith.constant 0 : index
    %42 = vector.load %arg5[%c0_8, %c0_9] : memref<128x1xf32, #tpu.memory_space<vmem>>, vector<128x1xf32>
    %43 = vector.broadcast %42 : vector<128x1xf32> to vector<128x128xf32>
    %44 = arith.addf %41, %43 : vector<128x128xf32>
    %45 = arith.negf %44 : vector<128x128xf32>
    %46 = math.exp %45 : vector<128x128xf32>
    %cst_10 = arith.constant 1.000000e+00 : f32
    %47 = vector.broadcast %cst_10 : f32 to vector<128x128xf32>
    %48 = arith.addf %47, %46 : vector<128x128xf32>
    %49 = arith.divf %47, %48 : vector<128x128xf32>
    %c0_11 = arith.constant 0 : index
    %c0_12 = arith.constant 0 : index
    %50 = vector.load %arg6[%c0_11, %c0_12] : memref<128x128xbf16, #tpu.memory_space<vmem>>, vector<128x128xbf16>
    %51 = arith.truncf %49 : vector<128x128xf32> to vector<128x128xbf16>
    %cst_13 = arith.constant dense<0.000000e+00> : vector<128x128xf32>
    %52 = tpu.matmul %50, %51, %cst_13 {dimension_numbers = #tpu.dot_dimension_numbers<[1], [0], [0], [1], [0, 0, 1, 1], [], []>} : vector<128x128xbf16>, vector<128x128xbf16>, vector<128x128xf32> -> vector<128x128xf32>
    %53 = vector.extract_strided_slice %52 {offsets = [0, 0], sizes = [8, 128], strides = [1, 1]} : vector<128x128xf32> to vector<8x128xf32>
    %c0_14 = arith.constant 0 : index
    %c0_15 = arith.constant 0 : index
    %54 = vector.load %arg7[%c0_14, %c0_15] : memref<8x1xf32, #tpu.memory_space<vmem>>, vector<8x1xf32>
    %55 = vector.broadcast %54 : vector<8x1xf32> to vector<8x128xf32>
    %56 = arith.addf %53, %55 : vector<8x128xf32>
    %c0_16 = arith.constant 0 : index
    %c0_17 = arith.constant 0 : index
    %57 = vector.load %arg8[%c0_16, %c0_17] : memref<8x128xf32, #tpu.memory_space<vmem>>, vector<8x128xf32>
    tpu.vector_store %arg8[%c0_16, %c0_17], %56 {strides = array<i32>} : memref<8x128xf32, #tpu.memory_space<vmem>>, vector<8x128xf32>,
    return
  }
  func.func @transform_0(%arg0: i32) -> (i32, i32) {
    %c0_i32 = arith.constant 0 : i32
    %c0_i32_0 = arith.constant 0 : i32
    return %c0_i32, %arg0 : i32, i32
  }
  func.func @transform_1(%arg0: i32) -> (i32, i32) {
    %c0_i32 = arith.constant 0 : i32
    %c0_i32_0 = arith.constant 0 : i32
    %c0_i32_1 = arith.constant 0 : i32
    return %c0_i32, %c0_i32_0 : i32, i32
  }
  func.func @transform_2(%arg0: i32) -> (i32, i32) {
    %c0_i32 = arith.constant 0 : i32
    %c0_i32_0 = arith.constant 0 : i32
    %c0_i32_1 = arith.constant 0 : i32
    return %c0_i32, %c0_i32_0 : i32, i32
  }
  func.func @transform_3(%arg0: i32) -> (i32, i32) {
    %c0_i32 = arith.constant 0 : i32
    %c0_i32_0 = arith.constant 0 : i32
    %c0_i32_1 = arith.constant 0 : i32
    return %c0_i32, %c0_i32_0 : i32, i32
  }
  func.func @transform_4(%arg0: i32) -> (i32, i32) {
    %c0_i32 = arith.constant 0 : i32
    %c0_i32_0 = arith.constant 0 : i32
    %c0_i32_1 = arith.constant 0 : i32
    return %c0_i32, %c0_i32_0 : i32, i32
  }
  func.func @transform_5(%arg0: i32) -> (i32, i32) {
    %c0_i32 = arith.constant 0 : i32
    %c0_i32_0 = arith.constant 0 : i32
    %c0_i32_1 = arith.constant 0 : i32
    return %c0_i32, %c0_i32_0 : i32, i32
  }
  func.func @transform_6(%arg0: i32) -> (i32, i32) {
    %c0_i32 = arith.constant 0 : i32
    %c0_i32_0 = arith.constant 0 : i32
    %c0_i32_1 = arith.constant 0 : i32
    return %c0_i32, %c0_i32_0 : i32, i32
  }
  func.func @transform_7(%arg0: i32) -> (i32, i32) {
    %c0_i32 = arith.constant 0 : i32
    %c0_i32_0 = arith.constant 0 : i32
    return %c0_i32, %arg0 : i32, i32
  }
}

</mosaic_0001>

<llo_original>
// kernel: classifier_forward.1
$region0: #{classifier_forward.1}
  #allocation0 [shape = 'u32[]', space=smem, size = 0x4, offset = 0x4, fixed_abs, tag = 'smem constant byte address 0x4 - core index']
  #allocation1 [shape = 'u32[144,128]{1,0:T(1,128)}', space=vmem, size = 0x12000, scoped, tag = 'internal scratch']
  %s0 = inlined_call_operand.vmem [shape: f32[5,128], index: 0, kind: input, shape index: {}]
  %s1 = inlined_call_operand.vmem [shape: f32[512,5], index: 1, kind: input, shape index: {}]
  %s2 = inlined_call_operand.vmem [shape: f32[512,1], index: 2, kind: input, shape index: {}]
  %s3 = inlined_call_operand.vmem [shape: bf16[128,512], index: 3, kind: input, shape index: {}]
  %s4 = inlined_call_operand.vmem [shape: f32[128,1], index: 4, kind: input, shape index: {}]
  %s5 = inlined_call_operand.vmem [shape: bf16[128,128], index: 5, kind: input, shape index: {}]
  %s6 = inlined_call_operand.vmem [shape: f32[8,1], index: 6, kind: input, shape index: {}]
  %s7 = inlined_call_operand.vmem [shape: f32[8,128], index: 7, kind: output, shape index: {}]
  %s8 = sld [smem:[#allocation0]]
  $region38: #{classifier_forward.1} parent=0
    _
  %s10 = ssub.s32 1, %s8
  %s11 = scalar_select 0, %s10, %s8
  // Predicated region
  $region2: #{classifier_forward.1} parent=0 // pred_check
    _
  $region3: #{classifier_forward.1} parent=0 // pred_check_branch
    %13 = sbr.rel (0) target = $region5
  $region4: #{classifier_forward.1} parent=0 // pred_region
    _
  $region5: #{classifier_forward.1} parent=0 // pred_fallthru
    _
  // Predicated region
  $region6: #{classifier_forward.1} parent=0 // pred_check
    _
  $region7: #{classifier_forward.1} parent=0 // pred_check_branch
    %15 = sbr.rel (0) target = $region9
  $region8: #{classifier_forward.1} parent=0 // pred_region
    _
  $region9: #{classifier_forward.1} parent=0 // pred_fallthru
    _
  // Predicated region
  $region10: #{classifier_forward.1} parent=0 // pred_check
    _
  $region11: #{classifier_forward.1} parent=0 // pred_check_branch
    %17 = sbr.rel (0) target = $region13
  $region12: #{classifier_forward.1} parent=0 // pred_region
    _
  $region13: #{classifier_forward.1} parent=0 // pred_fallthru
    _
  // Predicated region
  $region14: #{classifier_forward.1} parent=0 // pred_check
    _
  $region15: #{classifier_forward.1} parent=0 // pred_check_branch
    %19 = sbr.rel (0) target = $region17
  $region16: #{classifier_forward.1} parent=0 // pred_region
    _
  $region17: #{classifier_forward.1} parent=0 // pred_fallthru
    _
  // Predicated region
  $region18: #{classifier_forward.1} parent=0 // pred_check
    _
  $region19: #{classifier_forward.1} parent=0 // pred_check_branch
    %21 = sbr.rel (0) target = $region21
  $region20: #{classifier_forward.1} parent=0 // pred_region
    _
  $region21: #{classifier_forward.1} parent=0 // pred_fallthru
    _
  // Predicated region
  $region22: #{classifier_forward.1} parent=0 // pred_check
    _
  $region23: #{classifier_forward.1} parent=0 // pred_check_branch
    %23 = sbr.rel (0) target = $region25
  $region24: #{classifier_forward.1} parent=0 // pred_region
    _
  $region25: #{classifier_forward.1} parent=0 // pred_fallthru
    _
  // Predicated region
  $region26: #{classifier_forward.1} parent=0 // pred_check
    _
  $region27: #{classifier_forward.1} parent=0 // pred_check_branch
    %25 = sbr.rel (0) target = $region29
  $region28: #{classifier_forward.1} parent=0 // pred_region
    _
  $region29: #{classifier_forward.1} parent=0 // pred_fallthru
    _
  %v27 = vld [vmem:[%s0] sm:$0x1f]
  %v28 = vld [vmem:[%s1] sm:$0xff]
  %v29 = vld [vmem:[%s1 + $0x8] sm:$0xff]
  %v30 = vld [vmem:[%s1 + $0x10] sm:$0xff]
  %v31 = vld [vmem:[%s1 + $0x18] sm:$0xff]
  %v32 = vld [vmem:[%s1 + $0x20] sm:$0xff]
  %v33 = vld [vmem:[%s1 + $0x28] sm:$0xff]
  %v34 = vld [vmem:[%s1 + $0x30] sm:$0xff]
  %v35 = vld [vmem:[%s1 + $0x38] sm:$0xff]
  %v36 = vld [vmem:[%s1 + $0x40] sm:$0xff]
  %v37 = vld [vmem:[%s1 + $0x48] sm:$0xff]
  %v38 = vld [vmem:[%s1 + $0x50] sm:$0xff]
  %v39 = vld [vmem:[%s1 + $0x58] sm:$0xff]
  %v40 = vld [vmem:[%s1 + $0x60] sm:$0xff]
  %v41 = vld [vmem:[%s1 + $0x68] sm:$0xff]
  %v42 = vld [vmem:[%s1 + $0x70] sm:$0xff]
  %v43 = vld [vmem:[%s1 + $0x78] sm:$0xff]
  %v44 = vld [vmem:[%s1 + $0x80] sm:$0xff]
  %v45 = vld [vmem:[%s1 + $0x88] sm:$0xff]
  %v46 = vld [vmem:[%s1 + $0x90] sm:$0xff]
  %v47 = vld [vmem:[%s1 + $0x98] sm:$0xff]
  %v48 = vld [vmem:[%s1 + $0xa0] sm:$0xff]
  %v49 = vld [vmem:[%s1 + $0xa8] sm:$0xff]
  %v50 = vld [vmem:[%s1 + $0xb0] sm:$0xff]
  %v51 = vld [vmem:[%s1 + $0xb8] sm:$0xff]
  %v52 = vld [vmem:[%s1 + $0xc0] sm:$0xff]
  %v53 = vld [vmem:[%s1 + $0xc8] sm:$0xff]
  %v54 = vld [vmem:[%s1 + $0xd0] sm:$0xff]
  %v55 = vld [vmem:[%s1 + $0xd8] sm:$0xff]
  %v56 = vld [vmem:[%s1 + $0xe0] sm:$0xff]
  %v57 = vld [vmem:[%s1 + $0xe8] sm:$0xff]
  %v58 = vld [vmem:[%s1 + $0xf0] sm:$0xff]
  %v59 = vld [vmem:[%s1 + $0xf8] sm:$0xff]
  %v60 = vld [vmem:[%s1 + $0x100] sm:$0xff]
  %v61 = vld [vmem:[%s1 + $0x108] sm:$0xff]
  %v62 = vld [vmem:[%s1 + $0x110] sm:$0xff]
  %v63 = vld [vmem:[%s1 + $0x118] sm:$0xff]
  %v64 = vld [vmem:[%s1 + $0x120] sm:$0xff]
  %v65 = vld [vmem:[%s1 + $0x128] sm:$0xff]
  %v66 = vld [vmem:[%s1 + $0x130] sm:$0xff]
  %v67 = vld [vmem:[%s1 + $0x138] sm:$0xff]
  %v68 = vld [vmem:[%s1 + $0x140] sm:$0xff]
  %v69 = vld [vmem:[%s1 + $0x148] sm:$0xff]
  %v70 = vld [vmem:[%s1 + $0x150] sm:$0xff]
  %v71 = vld [vmem:[%s1 + $0x158] sm:$0xff]
  %v72 = vld [vmem:[%s1 + $0x160] sm:$0xff]
  %v73 = vld [vmem:[%s1 + $0x168] sm:$0xff]
  %v74 = vld [vmem:[%s1 + $0x170] sm:$0xff]
  %v75 = vld [vmem:[%s1 + $0x178] sm:$0xff]
  %v76 = vld [vmem:[%s1 + $0x180] sm:$0xff]
  %v77 = vld [vmem:[%s1 + $0x188] sm:$0xff]
  %v78 = vld [vmem:[%s1 + $0x190] sm:$0xff]
  %v79 = vld [vmem:[%s1 + $0x198] sm:$0xff]
  %v80 = vld [vmem:[%s1 + $0x1a0] sm:$0xff]
  %v81 = vld [vmem:[%s1 + $0x1a8] sm:$0xff]
  %v82 = vld [vmem:[%s1 + $0x1b0] sm:$0xff]
  %v83 = vld [vmem:[%s1 + $0x1b8] sm:$0xff]
  %v84 = vld [vmem:[%s1 + $0x1c0] sm:$0xff]
  %v85 = vld [vmem:[%s1 + $0x1c8] sm:$0xff]
  %v86 = vld [vmem:[%s1 + $0x1d0] sm:$0xff]
  %v87 = vld [vmem:[%s1 + $0x1d8] sm:$0xff]
  %v88 = vld [vmem:[%s1 + $0x1e0] sm:$0xff]
  %v89 = vld [vmem:[%s1 + $0x1e8] sm:$0xff]
  %v90 = vld [vmem:[%s1 + $0x1f0] sm:$0xff]
  %v91 = vld [vmem:[%s1 + $0x1f8] sm:$0xff]
  %93 = vset.pattern.permute.xlu0 0
  %94 = vperm.xlu0 %93, %v28
  %v95 = vpop.permute.xlu0 %94
  %98 = vset.pattern.permute.xlu0 0
  %99 = vperm.xlu0 %98, %v29
  %v100 = vpop.permute.xlu0 %99
  %103 = vset.pattern.permute.xlu0 0
  %104 = vperm.xlu0 %103, %v30
  %v105 = vpop.permute.xlu0 %104
  %108 = vset.pattern.permute.xlu0 0
  %109 = vperm.xlu0 %108, %v31
  %v110 = vpop.permute.xlu0 %109
  %113 = vset.pattern.permute.xlu0 0
  %114 = vperm.xlu0 %113, %v32
  %v115 = vpop.permute.xlu0 %114
  %118 = vset.pattern.permute.xlu0 0
  %119 = vperm.xlu0 %118, %v33
  %v120 = vpop.permute.xlu0 %119
  %123 = vset.pattern.permute.xlu0 0
  %124 = vperm.xlu0 %123, %v34
  %v125 = vpop.permute.xlu0 %124
  %128 = vset.pattern.permute.xlu0 0
  %129 = vperm.xlu0 %128, %v35
  %v130 = vpop.permute.xlu0 %129
  %133 = vset.pattern.permute.xlu0 0
  %134 = vperm.xlu0 %133, %v36
  %v135 = vpop.permute.xlu0 %134
  %138 = vset.pattern.permute.xlu0 0
  %139 = vperm.xlu0 %138, %v37
  %v140 = vpop.permute.xlu0 %139
  %143 = vset.pattern.permute.xlu0 0
  %144 = vperm.xlu0 %143, %v38
  %v145 = vpop.permute.xlu0 %144
  %148 = vset.pattern.permute.xlu0 0
  %149 = vperm.xlu0 %148, %v39
  %v150 = vpop.permute.xlu0 %149
  %153 = vset.pattern.permute.xlu0 0
  %154 = vperm.xlu0 %153, %v40
  %v155 = vpop.permute.xlu0 %154
  %158 = vset.pattern.permute.xlu0 0
  %159 = vperm.xlu0 %158, %v41
  %v160 = vpop.permute.xlu0 %159
  %163 = vset.pattern.permute.xlu0 0
  %164 = vperm.xlu0 %163, %v42
  %v165 = vpop.permute.xlu0 %164
  %168 = vset.pattern.permute.xlu0 0
  %169 = vperm.xlu0 %168, %v43
  %v170 = vpop.permute.xlu0 %169
  %173 = vset.pattern.permute.xlu0 0
  %174 = vperm.xlu0 %173, %v44
  %v175 = vpop.permute.xlu0 %174
  %178 = vset.pattern.permute.xlu0 0
  %179 = vperm.xlu0 %178, %v45
  %v180 = vpop.permute.xlu0 %179
  %183 = vset.pattern.permute.xlu0 0
  %184 = vperm.xlu0 %183, %v46
  %v185 = vpop.permute.xlu0 %184
  %188 = vset.pattern.permute.xlu0 0
  %189 = vperm.xlu0 %188, %v47
  %v190 = vpop.permute.xlu0 %189
  %193 = vset.pattern.permute.xlu0 0
  %194 = vperm.xlu0 %193, %v48
  %v195 = vpop.permute.xlu0 %194
  %198 = vset.pattern.permute.xlu0 0
  %199 = vperm.xlu0 %198, %v49
  %v200 = vpop.permute.xlu0 %199
  %203 = vset.pattern.permute.xlu0 0
  %204 = vperm.xlu0 %203, %v50
  %v205 = vpop.permute.xlu0 %204
  %208 = vset.pattern.permute.xlu0 0
  %209 = vperm.xlu0 %208, %v51
  %v210 = vpop.permute.xlu0 %209
  %213 = vset.pattern.permute.xlu0 0
  %214 = vperm.xlu0 %213, %v52
  %v215 = vpop.permute.xlu0 %214
  %218 = vset.pattern.permute.xlu0 0
  %219 = vperm.xlu0 %218, %v53
  %v220 = vpop.permute.xlu0 %219
  %223 = vset.pattern.permute.xlu0 0
  %224 = vperm.xlu0 %223, %v54
  %v225 = vpop.permute.xlu0 %224
  %228 = vset.pattern.permute.xlu0 0
  %229 = vperm.xlu0 %228, %v55
  %v230 = vpop.permute.xlu0 %229
  %233 = vset.pattern.permute.xlu0 0
  %234 = vperm.xlu0 %233, %v56
  %v235 = vpop.permute.xlu0 %234
  %238 = vset.pattern.permute.xlu0 0
  %239 = vperm.xlu0 %238, %v57
  %v240 = vpop.permute.xlu0 %239
  %243 = vset.pattern.permute.xlu0 0
  %244 = vperm.xlu0 %243, %v58
  %v245 = vpop.permute.xlu0 %244
  %248 = vset.pattern.permute.xlu0 0
  %249 = vperm.xlu0 %248, %v59
  %v250 = vpop.permute.xlu0 %249
  %253 = vset.pattern.permute.xlu0 0
  %254 = vperm.xlu0 %253, %v60
  %v255 = vpop.permute.xlu0 %254
  %258 = vset.pattern.permute.xlu0 0
  %259 = vperm.xlu0 %258, %v61
  %v260 = vpop.permute.xlu0 %259
  %263 = vset.pattern.permute.xlu0 0
  %264 = vperm.xlu0 %263, %v62
  %v265 = vpop.permute.xlu0 %264
  %268 = vset.pattern.permute.xlu0 0
  %269 = vperm.xlu0 %268, %v63
  %v270 = vpop.permute.xlu0 %269
  %273 = vset.pattern.permute.xlu0 0
  %274 = vperm.xlu0 %273, %v64
  %v275 = vpop.permute.xlu0 %274
  %278 = vset.pattern.permute.xlu0 0
  %279 = vperm.xlu0 %278, %v65
  %v280 = vpop.permute.xlu0 %279
  %283 = vset.pattern.permute.xlu0 0
  %284 = vperm.xlu0 %283, %v66
  %v285 = vpop.permute.xlu0 %284
  %288 = vset.pattern.permute.xlu0 0
  %289 = vperm.xlu0 %288, %v67
  %v290 = vpop.permute.xlu0 %289
  %293 = vset.pattern.permute.xlu0 0
  %294 = vperm.xlu0 %293, %v68
  %v295 = vpop.permute.xlu0 %294
  %298 = vset.pattern.permute.xlu0 0
  %299 = vperm.xlu0 %298, %v69
  %v300 = vpop.permute.xlu0 %299
  %303 = vset.pattern.permute.xlu0 0
  %304 = vperm.xlu0 %303, %v70
  %v305 = vpop.permute.xlu0 %304
  %308 = vset.pattern.permute.xlu0 0
  %309 = vperm.xlu0 %308, %v71
  %v310 = vpop.permute.xlu0 %309
  %313 = vset.pattern.permute.xlu0 0
  %314 = vperm.xlu0 %313, %v72
  %v315 = vpop.permute.xlu0 %314
  %318 = vset.pattern.permute.xlu0 0
  %319 = vperm.xlu0 %318, %v73
  %v320 = vpop.permute.xlu0 %319
  %323 = vset.pattern.permute.xlu0 0
  %324 = vperm.xlu0 %323, %v74
  %v325 = vpop.permute.xlu0 %324
  %328 = vset.pattern.permute.xlu0 0
  %329 = vperm.xlu0 %328, %v75
  %v330 = vpop.permute.xlu0 %329
  %333 = vset.pattern.permute.xlu0 0
  %334 = vperm.xlu0 %333, %v76
  %v335 = vpop.permute.xlu0 %334
  %338 = vset.pattern.permute.xlu0 0
  %339 = vperm.xlu0 %338, %v77
  %v340 = vpop.permute.xlu0 %339
  %343 = vset.pattern.permute.xlu0 0
  %344 = vperm.xlu0 %343, %v78
  %v345 = vpop.permute.xlu0 %344
  %348 = vset.pattern.permute.xlu0 0
  %349 = vperm.xlu0 %348, %v79
  %v350 = vpop.permute.xlu0 %349
  %353 = vset.pattern.permute.xlu0 0
  %354 = vperm.xlu0 %353, %v80
  %v355 = vpop.permute.xlu0 %354
  %358 = vset.pattern.permute.xlu0 0
  %359 = vperm.xlu0 %358, %v81
  %v360 = vpop.permute.xlu0 %359
  %363 = vset.pattern.permute.xlu0 0
  %364 = vperm.xlu0 %363, %v82
  %v365 = vpop.permute.xlu0 %364
  %368 = vset.pattern.permute.xlu0 0
  %369 = vperm.xlu0 %368, %v83
  %v370 = vpop.permute.xlu0 %369
  %373 = vset.pattern.permute.xlu0 0
  %374 = vperm.xlu0 %373, %v84
  %v375 = vpop.permute.xlu0 %374
  %378 = vset.pattern.permute.xlu0 0
  %379 = vperm.xlu0 %378, %v85
  %v380 = vpop.permute.xlu0 %379
  %383 = vset.pattern.permute.xlu0 0
  %384 = vperm.xlu0 %383, %v86
  %v385 = vpop.permute.xlu0 %384
  %388 = vset.pattern.permute.xlu0 0
  %389 = vperm.xlu0 %388, %v87
  %v390 = vpop.permute.xlu0 %389
  %393 = vset.pattern.permute.xlu0 0
  %394 = vperm.xlu0 %393, %v88
  %v395 = vpop.permute.xlu0 %394
  %398 = vset.pattern.permute.xlu0 0
  %399 = vperm.xlu0 %398, %v89
  %v400 = vpop.permute.xlu0 %399
  %403 = vset.pattern.permute.xlu0 0
  %404 = vperm.xlu0 %403, %v90
  %v405 = vpop.permute.xlu0 %404
  %408 = vset.pattern.permute.xlu0 0
  %409 = vperm.xlu0 %408, %v91
  %v410 = vpop.permute.xlu0 %409
  %v412 = vlaneseq
  %v413 = vshrl.u32 %v412, 7
  %v414 = vsub.s32 0, %v413
  %v415 = vrot.slane %v27, %v414
  %v416 = vmul.f32 %v95, %v415
  %v417 = vmul.f32 %v100, %v415
  %v418 = vmul.f32 %v105, %v415
  %v419 = vmul.f32 %v110, %v415
  %v420 = vmul.f32 %v115, %v415
  %v421 = vmul.f32 %v120, %v415
  %v422 = vmul.f32 %v125, %v415
  %v423 = vmul.f32 %v130, %v415
  %v424 = vmul.f32 %v135, %v415
  %v425 = vmul.f32 %v140, %v415
  %v426 = vmul.f32 %v145, %v415
  %v427 = vmul.f32 %v150, %v415
  %v428 = vmul.f32 %v155, %v415
  %v429 = vmul.f32 %v160, %v415
  %v430 = vmul.f32 %v165, %v415
  %v431 = vmul.f32 %v170, %v415
  %v432 = vmul.f32 %v175, %v415
  %v433 = vmul.f32 %v180, %v415
  %v434 = vmul.f32 %v185, %v415
  %v435 = vmul.f32 %v190, %v415
  %v436 = vmul.f32 %v195, %v415
  %v437 = vmul.f32 %v200, %v415
  %v438 = vmul.f32 %v205, %v415
  %v439 = vmul.f32 %v210, %v415
  %v440 = vmul.f32 %v215, %v415
  %v441 = vmul.f32 %v220, %v415
  %v442 = vmul.f32 %v225, %v415
  %v443 = vmul.f32 %v230, %v415
  %v444 = vmul.f32 %v235, %v415
  %v445 = vmul.f32 %v240, %v415
  %v446 = vmul.f32 %v245, %v415
  %v447 = vmul.f32 %v250, %v415
  %v448 = vmul.f32 %v255, %v415
  %v449 = vmul.f32 %v260, %v415
  %v450 = vmul.f32 %v265, %v415
  %v451 = vmul.f32 %v270, %v415
  %v452 = vmul.f32 %v275, %v415
  %v453 = vmul.f32 %v280, %v415
  %v454 = vmul.f32 %v285, %v415
  %v455 = vmul.f32 %v290, %v415
  %v456 = vmul.f32 %v295, %v415
  %v457 = vmul.f32 %v300, %v415
  %v458 = vmul.f32 %v305, %v415
  %v459 = vmul.f32 %v310, %v415
  %v460 = vmul.f32 %v315, %v415
  %v461 = vmul.f32 %v320, %v415
  %v462 = vmul.f32 %v325, %v415
  %v463 = vmul.f32 %v330, %v415
  %v464 = vmul.f32 %v335, %v415
  %v465 = vmul.f32 %v340, %v415
  %v466 = vmul.f32 %v345, %v415
  %v467 = vmul.f32 %v350, %v415
  %v468 = vmul.f32 %v355, %v415
  %v469 = vmul.f32 %v360, %v415
  %v470 = vmul.f32 %v365, %v415
  %v471 = vmul.f32 %v370, %v415
  %v472 = vmul.f32 %v375, %v415
  %v473 = vmul.f32 %v380, %v415
  %v474 = vmul.f32 %v385, %v415
  %v475 = vmul.f32 %v390, %v415
  %v476 = vmul.f32 %v395, %v415
  %v477 = vmul.f32 %v400, %v415
  %v478 = vmul.f32 %v405, %v415
  %v479 = vmul.f32 %v410, %v415
  %480 = vset.pattern.permute.xlu0 1
  %481 = vperm.xlu0 %480, %v28
  %v482 = vpop.permute.xlu0 %481
  %484 = vset.pattern.permute.xlu0 1
  %485 = vperm.xlu0 %484, %v29
  %v486 = vpop.permute.xlu0 %485
  %488 = vset.pattern.permute.xlu0 1
  %489 = vperm.xlu0 %488, %v30
  %v490 = vpop.permute.xlu0 %489
  %492 = vset.pattern.permute.xlu0 1
  %493 = vperm.xlu0 %492, %v31
  %v494 = vpop.permute.xlu0 %493
  %496 = vset.pattern.permute.xlu0 1
  %497 = vperm.xlu0 %496, %v32
  %v498 = vpop.permute.xlu0 %497
  %500 = vset.pattern.permute.xlu0 1
  %501 = vperm.xlu0 %500, %v33
  %v502 = vpop.permute.xlu0 %501
  %504 = vset.pattern.permute.xlu0 1
  %505 = vperm.xlu0 %504, %v34
  %v506 = vpop.permute.xlu0 %505
  %508 = vset.pattern.permute.xlu0 1
  %509 = vperm.xlu0 %508, %v35
  %v510 = vpop.permute.xlu0 %509
  %512 = vset.pattern.permute.xlu0 1
  %513 = vperm.xlu0 %512, %v36
  %v514 = vpop.permute.xlu0 %513
  %516 = vset.pattern.permute.xlu0 1
  %517 = vperm.xlu0 %516, %v37
  %v518 = vpop.permute.xlu0 %517
  %520 = vset.pattern.permute.xlu0 1
  %521 = vperm.xlu0 %520, %v38
  %v522 = vpop.permute.xlu0 %521
  %524 = vset.pattern.permute.xlu0 1
  %525 = vperm.xlu0 %524, %v39
  %v526 = vpop.permute.xlu0 %525
  %528 = vset.pattern.permute.xlu0 1
  %529 = vperm.xlu0 %528, %v40
  %v530 = vpop.permute.xlu0 %529
  %532 = vset.pattern.permute.xlu0 1
  %533 = vperm.xlu0 %532, %v41
  %v534 = vpop.permute.xlu0 %533
  %536 = vset.pattern.permute.xlu0 1
  %537 = vperm.xlu0 %536, %v42
  %v538 = vpop.permute.xlu0 %537
  %540 = vset.pattern.permute.xlu0 1
  %541 = vperm.xlu0 %540, %v43
  %v542 = vpop.permute.xlu0 %541
  %544 = vset.pattern.permute.xlu0 1
  %545 = vperm.xlu0 %544, %v44
  %v546 = vpop.permute.xlu0 %545
  %548 = vset.pattern.permute.xlu0 1
  %549 = vperm.xlu0 %548, %v45
  %v550 = vpop.permute.xlu0 %549
  %552 = vset.pattern.permute.xlu0 1
  %553 = vperm.xlu0 %552, %v46
  %v554 = vpop.permute.xlu0 %553
  %556 = vset.pattern.permute.xlu0 1
  %557 = vperm.xlu0 %556, %v47
  %v558 = vpop.permute.xlu0 %557
  %560 = vset.pattern.permute.xlu0 1
  %561 = vperm.xlu0 %560, %v48
  %v562 = vpop.permute.xlu0 %561
  %564 = vset.pattern.permute.xlu0 1
  %565 = vperm.xlu0 %564, %v49
  %v566 = vpop.permute.xlu0 %565
  %568 = vset.pattern.permute.xlu0 1
  %569 = vperm.xlu0 %568, %v50
  %v570 = vpop.permute.xlu0 %569
  %572 = vset.pattern.permute.xlu0 1
  %573 = vperm.xlu0 %572, %v51
  %v574 = vpop.permute.xlu0 %573
  %576 = vset.pattern.permute.xlu0 1
  %577 = vperm.xlu0 %576, %v52
  %v578 = vpop.permute.xlu0 %577
  %580 = vset.pattern.permute.xlu0 1
  %581 = vperm.xlu0 %580, %v53
  %v582 = vpop.permute.xlu0 %581
  %584 = vset.pattern.permute.xlu0 1
  %585 = vperm.xlu0 %584, %v54
  %v586 = vpop.permute.xlu0 %585
  %588 = vset.pattern.permute.xlu0 1
  %589 = vperm.xlu0 %588, %v55
  %v590 = vpop.permute.xlu0 %589
  %592 = vset.pattern.permute.xlu0 1
  %593 = vperm.xlu0 %592, %v56
  %v594 = vpop.permute.xlu0 %593
  %596 = vset.pattern.permute.xlu0 1
  %597 = vperm.xlu0 %596, %v57
  %v598 = vpop.permute.xlu0 %597
  %600 = vset.pattern.permute.xlu0 1
  %601 = vperm.xlu0 %600, %v58
  %v602 = vpop.permute.xlu0 %601
  %604 = vset.pattern.permute.xlu0 1
  %605 = vperm.xlu0 %604, %v59
  %v606 = vpop.permute.xlu0 %605
  %608 = vset.pattern.permute.xlu0 1
  %609 = vperm.xlu0 %608, %v60
  %v610 = vpop.permute.xlu0 %609
  %612 = vset.pattern.permute.xlu0 1
  %613 = vperm.xlu0 %612, %v61
  %v614 = vpop.permute.xlu0 %613
  %616 = vset.pattern.permute.xlu0 1
  %617 = vperm.xlu0 %616, %v62
  %v618 = vpop.permute.xlu0 %617
  %620 = vset.pattern.permute.xlu0 1
  %621 = vperm.xlu0 %620, %v63
  %v622 = vpop.permute.xlu0 %621
  %624 = vset.pattern.permute.xlu0 1
  %625 = vperm.xlu0 %624, %v64
  %v626 = vpop.permute.xlu0 %625
  %628 = vset.pattern.permute.xlu0 1
  %629 = vperm.xlu0 %628, %v65
  %v630 = vpop.permute.xlu0 %629
  %632 = vset.pattern.permute.xlu0 1
  %633 = vperm.xlu0 %632, %v66
  %v634 = vpop.permute.xlu0 %633
  %636 = vset.pattern.permute.xlu0 1
  %637 = vperm.xlu0 %636, %v67
  %v638 = vpop.permute.xlu0 %637
  %640 = vset.pattern.permute.xlu0 1
  %641 = vperm.xlu0 %640, %v68
  %v642 = vpop.permute.xlu0 %641
  %644 = vset.pattern.permute.xlu0 1
  %645 = vperm.xlu0 %644, %v69
  %v646 = vpop.permute.xlu0 %645
  %648 = vset.pattern.permute.xlu0 1
  %649 = vperm.xlu0 %648, %v70
  %v650 = vpop.permute.xlu0 %649
  %652 = vset.pattern.permute.xlu0 1
  %653 = vperm.xlu0 %652, %v71
  %v654 = vpop.permute.xlu0 %653
  %656 = vset.pattern.permute.xlu0 1
  %657 = vperm.xlu0 %656, %v72
  %v658 = vpop.permute.xlu0 %657
  %660 = vset.pattern.permute.xlu0 1
  %661 = vperm.xlu0 %660, %v73
  %v662 = vpop.permute.xlu0 %661
  %664 = vset.pattern.permute.xlu0 1
  %665 = vperm.xlu0 %664, %v74
  %v666 = vpop.permute.xlu0 %665
  %668 = vset.pattern.permute.xlu0 1
  %669 = vperm.xlu0 %668, %v75
  %v670 = vpop.permute.xlu0 %669
  %672 = vset.pattern.permute.xlu0 1
  %673 = vperm.xlu0 %672, %v76
  %v674 = vpop.permute.xlu0 %673
  %676 = vset.pattern.permute.xlu0 1
  %677 = vperm.xlu0 %676, %v77
  %v678 = vpop.permute.xlu0 %677
  %680 = vset.pattern.permute.xlu0 1
  %681 = vperm.xlu0 %680, %v78
  %v682 = vpop.permute.xlu0 %681
  %684 = vset.pattern.permute.xlu0 1
  %685 = vperm.xlu0 %684, %v79
  %v686 = vpop.permute.xlu0 %685
  %688 = vset.pattern.permute.xlu0 1
  %689 = vperm.xlu0 %688, %v80
  %v690 = vpop.permute.xlu0 %689
  %692 = vset.pattern.permute.xlu0 1
  %693 = vperm.xlu0 %692, %v81
  %v694 = vpop.permute.xlu0 %693
  %696 = vset.pattern.permute.xlu0 1
  %697 = vperm.xlu0 %696, %v82
  %v698 = vpop.permute.xlu0 %697
  %700 = vset.pattern.permute.xlu0 1
  %701 = vperm.xlu0 %700, %v83
  %v702 = vpop.permute.xlu0 %701
  %704 = vset.pattern.permute.xlu0 1
  %705 = vperm.xlu0 %704, %v84
  %v706 = vpop.permute.xlu0 %705
  %708 = vset.pattern.permute.xlu0 1
  %709 = vperm.xlu0 %708, %v85
  %v710 = vpop.permute.xlu0 %709
  %712 = vset.pattern.permute.xlu0 1
  %713 = vperm.xlu0 %712, %v86
  %v714 = vpop.permute.xlu0 %713
  %716 = vset.pattern.permute.xlu0 1
  %717 = vperm.xlu0 %716, %v87
  %v718 = vpop.permute.xlu0 %717
  %720 = vset.pattern.permute.xlu0 1
  %721 = vperm.xlu0 %720, %v88
  %v722 = vpop.permute.xlu0 %721
  %724 = vset.pattern.permute.xlu0 1
  %725 = vperm.xlu0 %724, %v89
  %v726 = vpop.permute.xlu0 %725
  %728 = vset.pattern.permute.xlu0 1
  %729 = vperm.xlu0 %728, %v90
  %v730 = vpop.permute.xlu0 %729
  %732 = vset.pattern.permute.xlu0 1
  %733 = vperm.xlu0 %732, %v91
  %v734 = vpop.permute.xlu0 %733
  %v736 = vlaneseq
  %v737 = vshrl.u32 %v736, 7
  %v738 = vsub.s32 1, %v737
  %v739 = vrot.slane %v27, %v738
  %v740 = vmul.f32 %v482, %v739
  %v741 = vmul.f32 %v486, %v739
  %v742 = vmul.f32 %v490, %v739
  %v743 = vmul.f32 %v494, %v739
  %v744 = vmul.f32 %v498, %v739
  %v745 = vmul.f32 %v502, %v739
  %v746 = vmul.f32 %v506, %v739
  %v747 = vmul.f32 %v510, %v739
  %v748 = vmul.f32 %v514, %v739
  %v749 = vmul.f32 %v518, %v739
  %v750 = vmul.f32 %v522, %v739
  %v751 = vmul.f32 %v526, %v739
  %v752 = vmul.f32 %v530, %v739
  %v753 = vmul.f32 %v534, %v739
  %v754 = vmul.f32 %v538, %v739
  %v755 = vmul.f32 %v542, %v739
  %v756 = vmul.f32 %v546, %v739
  %v757 = vmul.f32 %v550, %v739
  %v758 = vmul.f32 %v554, %v739
  %v759 = vmul.f32 %v558, %v739
  %v760 = vmul.f32 %v562, %v739
  %v761 = vmul.f32 %v566, %v739
  %v762 = vmul.f32 %v570, %v739
  %v763 = vmul.f32 %v574, %v739
  %v764 = vmul.f32 %v578, %v739
  %v765 = vmul.f32 %v582, %v739
  %v766 = vmul.f32 %v586, %v739
  %v767 = vmul.f32 %v590, %v739
  %v768 = vmul.f32 %v594, %v739
  %v769 = vmul.f32 %v598, %v739
  %v770 = vmul.f32 %v602, %v739
  %v771 = vmul.f32 %v606, %v739
  %v772 = vmul.f32 %v610, %v739
  %v773 = vmul.f32 %v614, %v739
  %v774 = vmul.f32 %v618, %v739
  %v775 = vmul.f32 %v622, %v739
  %v776 = vmul.f32 %v626, %v739
  %v777 = vmul.f32 %v630, %v739
  %v778 = vmul.f32 %v634, %v739
  %v779 = vmul.f32 %v638, %v739
  %v780 = vmul.f32 %v642, %v739
  %v781 = vmul.f32 %v646, %v739
  %v782 = vmul.f32 %v650, %v739
  %v783 = vmul.f32 %v654, %v739
  %v784 = vmul.f32 %v658, %v739
  %v785 = vmul.f32 %v662, %v739
  %v786 = vmul.f32 %v666, %v739
  %v787 = vmul.f32 %v670, %v739
  %v788 = vmul.f32 %v674, %v739
  %v789 = vmul.f32 %v678, %v739
  %v790 = vmul.f32 %v682, %v739
  %v791 = vmul.f32 %v686, %v739
  %v792 = vmul.f32 %v690, %v739
  %v793 = vmul.f32 %v694, %v739
  %v794 = vmul.f32 %v698, %v739
  %v795 = vmul.f32 %v702, %v739
  %v796 = vmul.f32 %v706, %v739
  %v797 = vmul.f32 %v710, %v739
  %v798 = vmul.f32 %v714, %v739
  %v799 = vmul.f32 %v718, %v739
  %v800 = vmul.f32 %v722, %v739
  %v801 = vmul.f32 %v726, %v739
  %v802 = vmul.f32 %v730, %v739
  %v803 = vmul.f32 %v734, %v739
  %v804 = vadd.f32 %v416, %v740
  %v805 = vadd.f32 %v417, %v741
  %v806 = vadd.f32 %v418, %v742
  %v807 = vadd.f32 %v419, %v743
  %v808 = vadd.f32 %v420, %v744
  %v809 = vadd.f32 %v421, %v745
  %v810 = vadd.f32 %v422, %v746
  %v811 = vadd.f32 %v423, %v747
  %v812 = vadd.f32 %v424, %v748
  %v813 = vadd.f32 %v425, %v749
  %v814 = vadd.f32 %v426, %v750
  %v815 = vadd.f32 %v427, %v751
  %v816 = vadd.f32 %v428, %v752
  %v817 = vadd.f32 %v429, %v753
  %v818 = vadd.f32 %v430, %v754
  %v819 = vadd.f32 %v431, %v755
  %v820 = vadd.f32 %v432, %v756
  %v821 = vadd.f32 %v433, %v757
  %v822 = vadd.f32 %v434, %v758
  %v823 = vadd.f32 %v435, %v759
  %v824 = vadd.f32 %v436, %v760
  %v825 = vadd.f32 %v437, %v761
  %v826 = vadd.f32 %v438, %v762
  %v827 = vadd.f32 %v439, %v763
  %v828 = vadd.f32 %v440, %v764
  %v829 = vadd.f32 %v441, %v765
  %v830 = vadd.f32 %v442, %v766
  %v831 = vadd.f32 %v443, %v767
  %v832 = vadd.f32 %v444, %v768
  %v833 = vadd.f32 %v445, %v769
  %v834 = vadd.f32 %v446, %v770
  %v835 = vadd.f32 %v447, %v771
  %v836 = vadd.f32 %v448, %v772
  %v837 = vadd.f32 %v449, %v773
  %v838 = vadd.f32 %v450, %v774
  %v839 = vadd.f32 %v451, %v775
  %v840 = vadd.f32 %v452, %v776
  %v841 = vadd.f32 %v453, %v777
  %v842 = vadd.f32 %v454, %v778
  %v843 = vadd.f32 %v455, %v779
  %v844 = vadd.f32 %v456, %v780
  %v845 = vadd.f32 %v457, %v781
  %v846 = vadd.f32 %v458, %v782
  %v847 = vadd.f32 %v459, %v783
  %v848 = vadd.f32 %v460, %v784
  %v849 = vadd.f32 %v461, %v785
  %v850 = vadd.f32 %v462, %v786
  %v851 = vadd.f32 %v463, %v787
  %v852 = vadd.f32 %v464, %v788
  %v853 = vadd.f32 %v465, %v789
  %v854 = vadd.f32 %v466, %v790
  %v855 = vadd.f32 %v467, %v791
  %v856 = vadd.f32 %v468, %v792
  %v857 = vadd.f32 %v469, %v793
  %v858 = vadd.f32 %v470, %v794
  %v859 = vadd.f32 %v471, %v795
  %v860 = vadd.f32 %v472, %v796
  %v861 = vadd.f32 %v473, %v797
  %v862 = vadd.f32 %v474, %v798
  %v863 = vadd.f32 %v475, %v799
  %v864 = vadd.f32 %v476, %v800
  %v865 = vadd.f32 %v477, %v801
  %v866 = vadd.f32 %v478, %v802
  %v867 = vadd.f32 %v479, %v803
  %868 = vset.pattern.permute.xlu0 2
  %869 = vperm.xlu0 %868, %v28
  %v870 = vpop.permute.xlu0 %869
  %872 = vset.pattern.permute.xlu0 2
  %873 = vperm.xlu0 %872, %v29
  %v874 = vpop.permute.xlu0 %873
  %876 = vset.pattern.permute.xlu0 2
  %877 = vperm.xlu0 %876, %v30
  %v878 = vpop.permute.xlu0 %877
  %880 = vset.pattern.permute.xlu0 2
  %881 = vperm.xlu0 %880, %v31
  %v882 = vpop.permute.xlu0 %881
  %884 = vset.pattern.permute.xlu0 2
  %885 = vperm.xlu0 %884, %v32
  %v886 = vpop.permute.xlu0 %885
  %888 = vset.pattern.permute.xlu0 2
  %889 = vperm.xlu0 %888, %v33
  %v890 = vpop.permute.xlu0 %889
  %892 = vset.pattern.permute.xlu0 2
  %893 = vperm.xlu0 %892, %v34
  %v894 = vpop.permute.xlu0 %893
  %896 = vset.pattern.permute.xlu0 2
  %897 = vperm.xlu0 %896, %v35
  %v898 = vpop.permute.xlu0 %897
  %900 = vset.pattern.permute.xlu0 2
  %901 = vperm.xlu0 %900, %v36
  %v902 = vpop.permute.xlu0 %901
  %904 = vset.pattern.permute.xlu0 2
  %905 = vperm.xlu0 %904, %v37
  %v906 = vpop.permute.xlu0 %905
  %908 = vset.pattern.permute.xlu0 2
  %909 = vperm.xlu0 %908, %v38
  %v910 = vpop.permute.xlu0 %909
  %912 = vset.pattern.permute.xlu0 2
  %913 = vperm.xlu0 %912, %v39
  %v914 = vpop.permute.xlu0 %913
  %916 = vset.pattern.permute.xlu0 2
  %917 = vperm.xlu0 %916, %v40
  %v918 = vpop.permute.xlu0 %917
  %920 = vset.pattern.permute.xlu0 2
  %921 = vperm.xlu0 %920, %v41
  %v922 = vpop.permute.xlu0 %921
  %924 = vset.pattern.permute.xlu0 2
  %925 = vperm.xlu0 %924, %v42
  %v926 = vpop.permute.xlu0 %925
  %928 = vset.pattern.permute.xlu0 2
  %929 = vperm.xlu0 %928, %v43
  %v930 = vpop.permute.xlu0 %929
  %932 = vset.pattern.permute.xlu0 2
  %933 = vperm.xlu0 %932, %v44
  %v934 = vpop.permute.xlu0 %933
  %936 = vset.pattern.permute.xlu0 2
  %937 = vperm.xlu0 %936, %v45
  %v938 = vpop.permute.xlu0 %937
  %940 = vset.pattern.permute.xlu0 2
  %941 = vperm.xlu0 %940, %v46
  %v942 = vpop.permute.xlu0 %941
  %944 = vset.pattern.permute.xlu0 2
  %945 = vperm.xlu0 %944, %v47
  %v946 = vpop.permute.xlu0 %945
  %948 = vset.pattern.permute.xlu0 2
  %949 = vperm.xlu0 %948, %v48
  %v950 = vpop.permute.xlu0 %949
  %952 = vset.pattern.permute.xlu0 2
  %953 = vperm.xlu0 %952, %v49
  %v954 = vpop.permute.xlu0 %953
  %956 = vset.pattern.permute.xlu0 2
  %957 = vperm.xlu0 %956, %v50
  %v958 = vpop.permute.xlu0 %957
  %960 = vset.pattern.permute.xlu0 2
  %961 = vperm.xlu0 %960, %v51
  %v962 = vpop.permute.xlu0 %961
  %964 = vset.pattern.permute.xlu0 2
  %965 = vperm.xlu0 %964, %v52
  %v966 = vpop.permute.xlu0 %965
  %968 = vset.pattern.permute.xlu0 2
  %969 = vperm.xlu0 %968, %v53
  %v970 = vpop.permute.xlu0 %969
  %972 = vset.pattern.permute.xlu0 2
  %973 = vperm.xlu0 %972, %v54
  %v974 = vpop.permute.xlu0 %973
  %976 = vset.pattern.permute.xlu0 2
  %977 = vperm.xlu0 %976, %v55
  %v978 = vpop.permute.xlu0 %977
  %980 = vset.pattern.permute.xlu0 2
  %981 = vperm.xlu0 %980, %v56
  %v982 = vpop.permute.xlu0 %981
  %984 = vset.pattern.permute.xlu0 2
  %985 = vperm.xlu0 %984, %v57
  %v986 = vpop.permute.xlu0 %985
  %988 = vset.pattern.permute.xlu0 2
  %989 = vperm.xlu0 %988, %v58
  %v990 = vpop.permute.xlu0 %989
  %992 = vset.pattern.permute.xlu0 2
  %993 = vperm.xlu0 %992, %v59
  %v994 = vpop.permute.xlu0 %993
  %996 = vset.pattern.permute.xlu0 2
  %997 = vperm.xlu0 %996, %v60
  %v998 = vpop.permute.xlu0 %997
  %1000 = vset.pattern.permute.xlu0 2
  %1001 = vperm.xlu0 %1000, %v61
  %v1002 = vpop.permute.xlu0 %1001
  %1004 = vset.pattern.permute.xlu0 2
  %1005 = vperm.xlu0 %1004, %v62
  %v1006 = vpop.permute.xlu0 %1005
  %1008 = vset.pattern.permute.xlu0 2
  %1009 = vperm.xlu0 %1008, %v63
  %v1010 = vpop.permute.xlu0 %1009
  %1012 = vset.pattern.permute.xlu0 2
  %1013 = vperm.xlu0 %1012, %v64
  %v1014 = vpop.permute.xlu0 %1013
  %1016 = vset.pattern.permute.xlu0 2
  %1017 = vperm.xlu0 %1016, %v65
  %v1018 = vpop.permute.xlu0 %1017
  %1020 = vset.pattern.permute.xlu0 2
  %1021 = vperm.xlu0 %1020, %v66
  %v1022 = vpop.permute.xlu0 %1021
  %1024 = vset.pattern.permute.xlu0 2
  %1025 = vperm.xlu0 %1024, %v67
  %v1026 = vpop.permute.xlu0 %1025
  %1028 = vset.pattern.permute.xlu0 2
  %1029 = vperm.xlu0 %1028, %v68
  %v1030 = vpop.permute.xlu0 %1029
  %1032 = vset.pattern.permute.xlu0 2
  %1033 = vperm.xlu0 %1032, %v69
  %v1034 = vpop.permute.xlu0 %1033
  %1036 = vset.pattern.permute.xlu0 2
  %1037 = vperm.xlu0 %1036, %v70
  %v1038 = vpop.permute.xlu0 %1037
  %1040 = vset.pattern.permute.xlu0 2
  %1041 = vperm.xlu0 %1040, %v71
  %v1042 = vpop.permute.xlu0 %1041
  %1044 = vset.pattern.permute.xlu0 2
  %1045 = vperm.xlu0 %1044, %v72
  %v1046 = vpop.permute.xlu0 %1045
  %1048 = vset.pattern.permute.xlu0 2
  %1049 = vperm.xlu0 %1048, %v73
  %v1050 = vpop.permute.xlu0 %1049
  %1052 = vset.pattern.permute.xlu0 2
  %1053 = vperm.xlu0 %1052, %v74
  %v1054 = vpop.permute.xlu0 %1053
  %1056 = vset.pattern.permute.xlu0 2
  %1057 = vperm.xlu0 %1056, %v75
  %v1058 = vpop.permute.xlu0 %1057
  %1060 = vset.pattern.permute.xlu0 2
  %1061 = vperm.xlu0 %1060, %v76
  %v1062 = vpop.permute.xlu0 %1061
  %1064 = vset.pattern.permute.xlu0 2
  %1065 = vperm.xlu0 %1064, %v77
  %v1066 = vpop.permute.xlu0 %1065
  %1068 = vset.pattern.permute.xlu0 2
  %1069 = vperm.xlu0 %1068, %v78
  %v1070 = vpop.permute.xlu0 %1069
  %1072 = vset.pattern.permute.xlu0 2
  %1073 = vperm.xlu0 %1072, %v79
  %v1074 = vpop.permute.xlu0 %1073
  %1076 = vset.pattern.permute.xlu0 2
  %1077 = vperm.xlu0 %1076, %v80
  %v1078 = vpop.permute.xlu0 %1077
  %1080 = vset.pattern.permute.xlu0 2
  %1081 = vperm.xlu0 %1080, %v81
  %v1082 = vpop.permute.xlu0 %1081
  %1084 = vset.pattern.permute.xlu0 2
  %1085 = vperm.xlu0 %1084, %v82
  %v1086 = vpop.permute.xlu0 %1085
  %1088 = vset.pattern.permute.xlu0 2
  %1089 = vperm.xlu0 %1088, %v83
  %v1090 = vpop.permute.xlu0 %1089
  %1092 = vset.pattern.permute.xlu0 2
  %1093 = vperm.xlu0 %1092, %v84
  %v1094 = vpop.permute.xlu0 %1093
  %1096 = vset.pattern.permute.xlu0 2
  %1097 = vperm.xlu0 %1096, %v85
  %v1098 = vpop.permute.xlu0 %1097
  %1100 = vset.pattern.permute.xlu0 2
  %1101 = vperm.xlu0 %1100, %v86
  %v1102 = vpop.permute.xlu0 %1101
  %1104 = vset.pattern.permute.xlu0 2
  %1105 = vperm.xlu0 %1104, %v87
  %v1106 = vpop.permute.xlu0 %1105
  %1108 = vset.pattern.permute.xlu0 2
  %1109 = vperm.xlu0 %1108, %v88
  %v1110 = vpop.permute.xlu0 %1109
  %1112 = vset.pattern.permute.xlu0 2
  %1113 = vperm.xlu0 %1112, %v89
  %v1114 = vpop.permute.xlu0 %1113
  %1116 = vset.pattern.permute.xlu0 2
  %1117 = vperm.xlu0 %1116, %v90
  %v1118 = vpop.permute.xlu0 %1117
  %1120 = vset.pattern.permute.xlu0 2
  %1121 = vperm.xlu0 %1120, %v91
  %v1122 = vpop.permute.xlu0 %1121
  %v1124 = vlaneseq
  %v1125 = vshrl.u32 %v1124, 7
  %v1126 = vsub.s32 2, %v1125
  %v1127 = vrot.slane %v27, %v1126
  %v1128 = vmul.f32 %v870, %v1127
  %v1129 = vmul.f32 %v874, %v1127
  %v1130 = vmul.f32 %v878, %v1127
  %v1131 = vmul.f32 %v882, %v1127
  %v1132 = vmul.f32 %v886, %v1127
  %v1133 = vmul.f32 %v890, %v1127
  %v1134 = vmul.f32 %v894, %v1127
  %v1135 = vmul.f32 %v898, %v1127
  %v1136 = vmul.f32 %v902, %v1127
  %v1137 = vmul.f32 %v906, %v1127
  %v1138 = vmul.f32 %v910, %v1127
  %v1139 = vmul.f32 %v914, %v1127
  %v1140 = vmul.f32 %v918, %v1127
  %v1141 = vmul.f32 %v922, %v1127
  %v1142 = vmul.f32 %v926, %v1127
  %v1143 = vmul.f32 %v930, %v1127
  %v1144 = vmul.f32 %v934, %v1127
  %v1145 = vmul.f32 %v938, %v1127
  %v1146 = vmul.f32 %v942, %v1127
  %v1147 = vmul.f32 %v946, %v1127
  %v1148 = vmul.f32 %v950, %v1127
  %v1149 = vmul.f32 %v954, %v1127
  %v1150 = vmul.f32 %v958, %v1127
  %v1151 = vmul.f32 %v962, %v1127
  %v1152 = vmul.f32 %v966, %v1127
  %v1153 = vmul.f32 %v970, %v1127
  %v1154 = vmul.f32 %v974, %v1127
  %v1155 = vmul.f32 %v978, %v1127
  %v1156 = vmul.f32 %v982, %v1127
  %v1157 = vmul.f32 %v986, %v1127
  %v1158 = vmul.f32 %v990, %v1127
  %v1159 = vmul.f32 %v994, %v1127
  %v1160 = vmul.f32 %v998, %v1127
  %v1161 = vmul.f32 %v1002, %v1127
  %v1162 = vmul.f32 %v1006, %v1127
  %v1163 = vmul.f32 %v1010, %v1127
  %v1164 = vmul.f32 %v1014, %v1127
  %v1165 = vmul.f32 %v1018, %v1127
  %v1166 = vmul.f32 %v1022, %v1127
  %v1167 = vmul.f32 %v1026, %v1127
  %v1168 = vmul.f32 %v1030, %v1127
  %v1169 = vmul.f32 %v1034, %v1127
  %v1170 = vmul.f32 %v1038, %v1127
  %v1171 = vmul.f32 %v1042, %v1127
  %v1172 = vmul.f32 %v1046, %v1127
  %v1173 = vmul.f32 %v1050, %v1127
  %v1174 = vmul.f32 %v1054, %v1127
  %v1175 = vmul.f32 %v1058, %v1127
  %v1176 = vmul.f32 %v1062, %v1127
  %v1177 = vmul.f32 %v1066, %v1127
  %v1178 = vmul.f32 %v1070, %v1127
  %v1179 = vmul.f32 %v1074, %v1127
  %v1180 = vmul.f32 %v1078, %v1127
  %v1181 = vmul.f32 %v1082, %v1127
  %v1182 = vmul.f32 %v1086, %v1127
  %v1183 = vmul.f32 %v1090, %v1127
  %v1184 = vmul.f32 %v1094, %v1127
  %v1185 = vmul.f32 %v1098, %v1127
  %v1186 = vmul.f32 %v1102, %v1127
  %v1187 = vmul.f32 %v1106, %v1127
  %v1188 = vmul.f32 %v1110, %v1127
  %v1189 = vmul.f32 %v1114, %v1127
  %v1190 = vmul.f32 %v1118, %v1127
  %v1191 = vmul.f32 %v1122, %v1127
  %v1192 = vadd.f32 %v804, %v1128
  %v1193 = vadd.f32 %v805, %v1129
  %v1194 = vadd.f32 %v806, %v1130
  %v1195 = vadd.f32 %v807, %v1131
  %v1196 = vadd.f32 %v808, %v1132
  %v1197 = vadd.f32 %v809, %v1133
  %v1198 = vadd.f32 %v810, %v1134
  %v1199 = vadd.f32 %v811, %v1135
  %v1200 = vadd.f32 %v812, %v1136
  %v1201 = vadd.f32 %v813, %v1137
  %v1202 = vadd.f32 %v814, %v1138
  %v1203 = vadd.f32 %v815, %v1139
  %v1204 = vadd.f32 %v816, %v1140
  %v1205 = vadd.f32 %v817, %v1141
  %v1206 = vadd.f32 %v818, %v1142
  %v1207 = vadd.f32 %v819, %v1143
  %v1208 = vadd.f32 %v820, %v1144
  %v1209 = vadd.f32 %v821, %v1145
  %v1210 = vadd.f32 %v822, %v1146
  %v1211 = vadd.f32 %v823, %v1147
  %v1212 = vadd.f32 %v824, %v1148
  %v1213 = vadd.f32 %v825, %v1149
  %v1214 = vadd.f32 %v826, %v1150
  %v1215 = vadd.f32 %v827, %v1151
  %v1216 = vadd.f32 %v828, %v1152
  %v1217 = vadd.f32 %v829, %v1153
  %v1218 = vadd.f32 %v830, %v1154
  %v1219 = vadd.f32 %v831, %v1155
  %v1220 = vadd.f32 %v832, %v1156
  %v1221 = vadd.f32 %v833, %v1157
  %v1222 = vadd.f32 %v834, %v1158
  %v1223 = vadd.f32 %v835, %v1159
  %v1224 = vadd.f32 %v836, %v1160
  %v1225 = vadd.f32 %v837, %v1161
  %v1226 = vadd.f32 %v838, %v1162
  %v1227 = vadd.f32 %v839, %v1163
  %v1228 = vadd.f32 %v840, %v1164
  %v1229 = vadd.f32 %v841, %v1165
  %v1230 = vadd.f32 %v842, %v1166
  %v1231 = vadd.f32 %v843, %v1167
  %v1232 = vadd.f32 %v844, %v1168
  %v1233 = vadd.f32 %v845, %v1169
  %v1234 = vadd.f32 %v846, %v1170
  %v1235 = vadd.f32 %v847, %v1171
  %v1236 = vadd.f32 %v848, %v1172
  %v1237 = vadd.f32 %v849, %v1173
  %v1238 = vadd.f32 %v850, %v1174
  %v1239 = vadd.f32 %v851, %v1175
  %v1240 = vadd.f32 %v852, %v1176
  %v1241 = vadd.f32 %v853, %v1177
  %v1242 = vadd.f32 %v854, %v1178
  %v1243 = vadd.f32 %v855, %v1179
  %v1244 = vadd.f32 %v856, %v1180
  %v1245 = vadd.f32 %v857, %v1181
  %v1246 = vadd.f32 %v858, %v1182
  %v1247 = vadd.f32 %v859, %v1183
  %v1248 = vadd.f32 %v860, %v1184
  %v1249 = vadd.f32 %v861, %v1185
  %v1250 = vadd.f32 %v862, %v1186
  %v1251 = vadd.f32 %v863, %v1187
  %v1252 = vadd.f32 %v864, %v1188
  %v1253 = vadd.f32 %v865, %v1189
  %v1254 = vadd.f32 %v866, %v1190
  %v1255 = vadd.f32 %v867, %v1191
  %1256 = vset.pattern.permute.xlu0 3
  %1257 = vperm.xlu0 %1256, %v28
  %v1258 = vpop.permute.xlu0 %1257
  %1260 = vset.pattern.permute.xlu0 3
  %1261 = vperm.xlu0 %1260, %v29
  %v1262 = vpop.permute.xlu0 %1261
  %1264 = vset.pattern.permute.xlu0 3
  %1265 = vperm.xlu0 %1264, %v30
  %v1266 = vpop.permute.xlu0 %1265
  %1268 = vset.pattern.permute.xlu0 3
  %1269 = vperm.xlu0 %1268, %v31
  %v1270 = vpop.permute.xlu0 %1269
  %1272 = vset.pattern.permute.xlu0 3
  %1273 = vperm.xlu0 %1272, %v32
  %v1274 = vpop.permute.xlu0 %1273
  %1276 = vset.pattern.permute.xlu0 3
  %1277 = vperm.xlu0 %1276, %v33
  %v1278 = vpop.permute.xlu0 %1277
  %1280 = vset.pattern.permute.xlu0 3
  %1281 = vperm.xlu0 %1280, %v34
  %v1282 = vpop.permute.xlu0 %1281
  %1284 = vset.pattern.permute.xlu0 3
  %1285 = vperm.xlu0 %1284, %v35
  %v1286 = vpop.permute.xlu0 %1285
  %1288 = vset.pattern.permute.xlu0 3
  %1289 = vperm.xlu0 %1288, %v36
  %v1290 = vpop.permute.xlu0 %1289
  %1292 = vset.pattern.permute.xlu0 3
  %1293 = vperm.xlu0 %1292, %v37
  %v1294 = vpop.permute.xlu0 %1293
  %1296 = vset.pattern.permute.xlu0 3
  %1297 = vperm.xlu0 %1296, %v38
  %v1298 = vpop.permute.xlu0 %1297
  %1300 = vset.pattern.permute.xlu0 3
  %1301 = vperm.xlu0 %1300, %v39
  %v1302 = vpop.permute.xlu0 %1301
  %1304 = vset.pattern.permute.xlu0 3
  %1305 = vperm.xlu0 %1304, %v40
  %v1306 = vpop.permute.xlu0 %1305
  %1308 = vset.pattern.permute.xlu0 3
  %1309 = vperm.xlu0 %1308, %v41
  %v1310 = vpop.permute.xlu0 %1309
  %1312 = vset.pattern.permute.xlu0 3
  %1313 = vperm.xlu0 %1312, %v42
  %v1314 = vpop.permute.xlu0 %1313
  %1316 = vset.pattern.permute.xlu0 3
  %1317 = vperm.xlu0 %1316, %v43
  %v1318 = vpop.permute.xlu0 %1317
  %1320 = vset.pattern.permute.xlu0 3
  %1321 = vperm.xlu0 %1320, %v44
  %v1322 = vpop.permute.xlu0 %1321
  %1324 = vset.pattern.permute.xlu0 3
  %1325 = vperm.xlu0 %1324, %v45
  %v1326 = vpop.permute.xlu0 %1325
  %1328 = vset.pattern.permute.xlu0 3
  %1329 = vperm.xlu0 %1328, %v46
  %v1330 = vpop.permute.xlu0 %1329
  %1332 = vset.pattern.permute.xlu0 3
  %1333 = vperm.xlu0 %1332, %v47
  %v1334 = vpop.permute.xlu0 %1333
  %1336 = vset.pattern.permute.xlu0 3
  %1337 = vperm.xlu0 %1336, %v48
  %v1338 = vpop.permute.xlu0 %1337
  %1340 = vset.pattern.permute.xlu0 3
  %1341 = vperm.xlu0 %1340, %v49
  %v1342 = vpop.permute.xlu0 %1341
  %1344 = vset.pattern.permute.xlu0 3
  %1345 = vperm.xlu0 %1344, %v50
  %v1346 = vpop.permute.xlu0 %1345
  %1348 = vset.pattern.permute.xlu0 3
  %1349 = vperm.xlu0 %1348, %v51
  %v1350 = vpop.permute.xlu0 %1349
  %1352 = vset.pattern.permute.xlu0 3
  %1353 = vperm.xlu0 %1352, %v52
  %v1354 = vpop.permute.xlu0 %1353
  %1356 = vset.pattern.permute.xlu0 3
  %1357 = vperm.xlu0 %1356, %v53
  %v1358 = vpop.permute.xlu0 %1357
  %1360 = vset.pattern.permute.xlu0 3
  %1361 = vperm.xlu0 %1360, %v54
  %v1362 = vpop.permute.xlu0 %1361
  %1364 = vset.pattern.permute.xlu0 3
  %1365 = vperm.xlu0 %1364, %v55
  %v1366 = vpop.permute.xlu0 %1365
  %1368 = vset.pattern.permute.xlu0 3
  %1369 = vperm.xlu0 %1368, %v56
  %v1370 = vpop.permute.xlu0 %1369
  %1372 = vset.pattern.permute.xlu0 3
  %1373 = vperm.xlu0 %1372, %v57
  %v1374 = vpop.permute.xlu0 %1373
  %1376 = vset.pattern.permute.xlu0 3
  %1377 = vperm.xlu0 %1376, %v58
  %v1378 = vpop.permute.xlu0 %1377
  %1380 = vset.pattern.permute.xlu0 3
  %1381 = vperm.xlu0 %1380, %v59
  %v1382 = vpop.permute.xlu0 %1381
  %1384 = vset.pattern.permute.xlu0 3
  %1385 = vperm.xlu0 %1384, %v60
  %v1386 = vpop.permute.xlu0 %1385
  %1388 = vset.pattern.permute.xlu0 3
  %1389 = vperm.xlu0 %1388, %v61
  %v1390 = vpop.permute.xlu0 %1389
  %1392 = vset.pattern.permute.xlu0 3
  %1393 = vperm.xlu0 %1392, %v62
  %v1394 = vpop.permute.xlu0 %1393
  %1396 = vset.pattern.permute.xlu0 3
  %1397 = vperm.xlu0 %1396, %v63
  %v1398 = vpop.permute.xlu0 %1397
  %1400 = vset.pattern.permute.xlu0 3
  %1401 = vperm.xlu0 %1400, %v64
  %v1402 = vpop.permute.xlu0 %1401
  %1404 = vset.pattern.permute.xlu0 3
  %1405 = vperm.xlu0 %1404, %v65
  %v1406 = vpop.permute.xlu0 %1405
  %1408 = vset.pattern.permute.xlu0 3
  %1409 = vperm.xlu0 %1408, %v66
  %v1410 = vpop.permute.xlu0 %1409
  %1412 = vset.pattern.permute.xlu0 3
  %1413 = vperm.xlu0 %1412, %v67
  %v1414 = vpop.permute.xlu0 %1413
  %1416 = vset.pattern.permute.xlu0 3
  %1417 = vperm.xlu0 %1416, %v68
  %v1418 = vpop.permute.xlu0 %1417
  %1420 = vset.pattern.permute.xlu0 3
  %1421 = vperm.xlu0 %1420, %v69
  %v1422 = vpop.permute.xlu0 %1421
  %1424 = vset.pattern.permute.xlu0 3
  %1425 = vperm.xlu0 %1424, %v70
  %v1426 = vpop.permute.xlu0 %1425
  %1428 = vset.pattern.permute.xlu0 3
  %1429 = vperm.xlu0 %1428, %v71
  %v1430 = vpop.permute.xlu0 %1429
  %1432 = vset.pattern.permute.xlu0 3
  %1433 = vperm.xlu0 %1432, %v72
  %v1434 = vpop.permute.xlu0 %1433
  %1436 = vset.pattern.permute.xlu0 3
  %1437 = vperm.xlu0 %1436, %v73
  %v1438 = vpop.permute.xlu0 %1437
  %1440 = vset.pattern.permute.xlu0 3
  %1441 = vperm.xlu0 %1440, %v74
  %v1442 = vpop.permute.xlu0 %1441
  %1444 = vset.pattern.permute.xlu0 3
  %1445 = vperm.xlu0 %1444, %v75
  %v1446 = vpop.permute.xlu0 %1445
  %1448 = vset.pattern.permute.xlu0 3
  %1449 = vperm.xlu0 %1448, %v76
  %v1450 = vpop.permute.xlu0 %1449
  %1452 = vset.pattern.permute.xlu0 3
  %1453 = vperm.xlu0 %1452, %v77
  %v1454 = vpop.permute.xlu0 %1453
  %1456 = vset.pattern.permute.xlu0 3
  %1457 = vperm.xlu0 %1456, %v78
  %v1458 = vpop.permute.xlu0 %1457
  %1460 = vset.pattern.permute.xlu0 3
  %1461 = vperm.xlu0 %1460, %v79
  %v1462 = vpop.permute.xlu0 %1461
  %1464 = vset.pattern.permute.xlu0 3
  %1465 = vperm.xlu0 %1464, %v80
  %v1466 = vpop.permute.xlu0 %1465
  %1468 = vset.pattern.permute.xlu0 3
  %1469 = vperm.xlu0 %1468, %v81
  %v1470 = vpop.permute.xlu0 %1469
  %1472 = vset.pattern.permute.xlu0 3
  %1473 = vperm.xlu0 %1472, %v82
  %v1474 = vpop.permute.xlu0 %1473
  %1476 = vset.pattern.permute.xlu0 3
  %1477 = vperm.xlu0 %1476, %v83
  %v1478 = vpop.permute.xlu0 %1477
  %1480 = vset.pattern.permute.xlu0 3
  %1481 = vperm.xlu0 %1480, %v84
  %v1482 = vpop.permute.xlu0 %1481
  %1484 = vset.pattern.permute.xlu0 3
  %1485 = vperm.xlu0 %1484, %v85
  %v1486 = vpop.permute.xlu0 %1485
  %1488 = vset.pattern.permute.xlu0 3
  %1489 = vperm.xlu0 %1488, %v86
  %v1490 = vpop.permute.xlu0 %1489
  %1492 = vset.pattern.permute.xlu0 3
  %1493 = vperm.xlu0 %1492, %v87
  %v1494 = vpop.permute.xlu0 %1493
  %1496 = vset.pattern.permute.xlu0 3
  %1497 = vperm.xlu0 %1496, %v88
  %v1498 = vpop.permute.xlu0 %1497
  %1500 = vset.pattern.permute.xlu0 3
  %1501 = vperm.xlu0 %1500, %v89
  %v1502 = vpop.permute.xlu0 %1501
  %1504 = vset.pattern.permute.xlu0 3
  %1505 = vperm.xlu0 %1504, %v90
  %v1506 = vpop.permute.xlu0 %1505
  %1508 = vset.pattern.permute.xlu0 3
  %1509 = vperm.xlu0 %1508, %v91
  %v1510 = vpop.permute.xlu0 %1509
  %v1512 = vlaneseq
  %v1513 = vshrl.u32 %v1512, 7
  %v1514 = vsub.s32 3, %v1513
  %v1515 = vrot.slane %v27, %v1514
  %v1516 = vmul.f32 %v1258, %v1515
  %v1517 = vmul.f32 %v1262, %v1515
  %v1518 = vmul.f32 %v1266, %v1515
  %v1519 = vmul.f32 %v1270, %v1515
  %v1520 = vmul.f32 %v1274, %v1515
  %v1521 = vmul.f32 %v1278, %v1515
  %v1522 = vmul.f32 %v1282, %v1515
  %v1523 = vmul.f32 %v1286, %v1515
  %v1524 = vmul.f32 %v1290, %v1515
  %v1525 = vmul.f32 %v1294, %v1515
  %v1526 = vmul.f32 %v1298, %v1515
  %v1527 = vmul.f32 %v1302, %v1515
  %v1528 = vmul.f32 %v1306, %v1515
  %v1529 = vmul.f32 %v1310, %v1515
  %v1530 = vmul.f32 %v1314, %v1515
  %v1531 = vmul.f32 %v1318, %v1515
  %v1532 = vmul.f32 %v1322, %v1515
  %v1533 = vmul.f32 %v1326, %v1515
  %v1534 = vmul.f32 %v1330, %v1515
  %v1535 = vmul.f32 %v1334, %v1515
  %v1536 = vmul.f32 %v1338, %v1515
  %v1537 = vmul.f32 %v1342, %v1515
  %v1538 = vmul.f32 %v1346, %v1515
  %v1539 = vmul.f32 %v1350, %v1515
  %v1540 = vmul.f32 %v1354, %v1515
  %v1541 = vmul.f32 %v1358, %v1515
  %v1542 = vmul.f32 %v1362, %v1515
  %v1543 = vmul.f32 %v1366, %v1515
  %v1544 = vmul.f32 %v1370, %v1515
  %v1545 = vmul.f32 %v1374, %v1515
  %v1546 = vmul.f32 %v1378, %v1515
  %v1547 = vmul.f32 %v1382, %v1515
  %v1548 = vmul.f32 %v1386, %v1515
  %v1549 = vmul.f32 %v1390, %v1515
  %v1550 = vmul.f32 %v1394, %v1515
  %v1551 = vmul.f32 %v1398, %v1515
  %v1552 = vmul.f32 %v1402, %v1515
  %v1553 = vmul.f32 %v1406, %v1515
  %v1554 = vmul.f32 %v1410, %v1515
  %v1555 = vmul.f32 %v1414, %v1515
  %v1556 = vmul.f32 %v1418, %v1515
  %v1557 = vmul.f32 %v1422, %v1515
  %v1558 = vmul.f32 %v1426, %v1515
  %v1559 = vmul.f32 %v1430, %v1515
  %v1560 = vmul.f32 %v1434, %v1515
  %v1561 = vmul.f32 %v1438, %v1515
  %v1562 = vmul.f32 %v1442, %v1515
  %v1563 = vmul.f32 %v1446, %v1515
  %v1564 = vmul.f32 %v1450, %v1515
  %v1565 = vmul.f32 %v1454, %v1515
  %v1566 = vmul.f32 %v1458, %v1515
  %v1567 = vmul.f32 %v1462, %v1515
  %v1568 = vmul.f32 %v1466, %v1515
  %v1569 = vmul.f32 %v1470, %v1515
  %v1570 = vmul.f32 %v1474, %v1515
  %v1571 = vmul.f32 %v1478, %v1515
  %v1572 = vmul.f32 %v1482, %v1515
  %v1573 = vmul.f32 %v1486, %v1515
  %v1574 = vmul.f32 %v1490, %v1515
  %v1575 = vmul.f32 %v1494, %v1515
  %v1576 = vmul.f32 %v1498, %v1515
  %v1577 = vmul.f32 %v1502, %v1515
  %v1578 = vmul.f32 %v1506, %v1515
  %v1579 = vmul.f32 %v1510, %v1515
  %v1580 = vadd.f32 %v1192, %v1516
  %v1581 = vadd.f32 %v1193, %v1517
  %v1582 = vadd.f32 %v1194, %v1518
  %v1583 = vadd.f32 %v1195, %v1519
  %v1584 = vadd.f32 %v1196, %v1520
  %v1585 = vadd.f32 %v1197, %v1521
  %v1586 = vadd.f32 %v1198, %v1522
  %v1587 = vadd.f32 %v1199, %v1523
  %v1588 = vadd.f32 %v1200, %v1524
  %v1589 = vadd.f32 %v1201, %v1525
  %v1590 = vadd.f32 %v1202, %v1526
  %v1591 = vadd.f32 %v1203, %v1527
  %v1592 = vadd.f32 %v1204, %v1528
  %v1593 = vadd.f32 %v1205, %v1529
  %v1594 = vadd.f32 %v1206, %v1530
  %v1595 = vadd.f32 %v1207, %v1531
  %v1596 = vadd.f32 %v1208, %v1532
  %v1597 = vadd.f32 %v1209, %v1533
  %v1598 = vadd.f32 %v1210, %v1534
  %v1599 = vadd.f32 %v1211, %v1535
  %v1600 = vadd.f32 %v1212, %v1536
  %v1601 = vadd.f32 %v1213, %v1537
  %v1602 = vadd.f32 %v1214, %v1538
  %v1603 = vadd.f32 %v1215, %v1539
  %v1604 = vadd.f32 %v1216, %v1540
  %v1605 = vadd.f32 %v1217, %v1541
  %v1606 = vadd.f32 %v1218, %v1542
  %v1607 = vadd.f32 %v1219, %v1543
  %v1608 = vadd.f32 %v1220, %v1544
  %v1609 = vadd.f32 %v1221, %v1545
  %v1610 = vadd.f32 %v1222, %v1546
  %v1611 = vadd.f32 %v1223, %v1547
  %v1612 = vadd.f32 %v1224, %v1548
  %v1613 = vadd.f32 %v1225, %v1549
  %v1614 = vadd.f32 %v1226, %v1550
  %v1615 = vadd.f32 %v1227, %v1551
  %v1616 = vadd.f32 %v1228, %v1552
  %v1617 = vadd.f32 %v1229, %v1553
  %v1618 = vadd.f32 %v1230, %v1554
  %v1619 = vadd.f32 %v1231, %v1555
  %v1620 = vadd.f32 %v1232, %v1556
  %v1621 = vadd.f32 %v1233, %v1557
  %v1622 = vadd.f32 %v1234, %v1558
  %v1623 = vadd.f32 %v1235, %v1559
  %v1624 = vadd.f32 %v1236, %v1560
  %v1625 = vadd.f32 %v1237, %v1561
  %v1626 = vadd.f32 %v1238, %v1562
  %v1627 = vadd.f32 %v1239, %v1563
  %v1628 = vadd.f32 %v1240, %v1564
  %v1629 = vadd.f32 %v1241, %v1565
  %v1630 = vadd.f32 %v1242, %v1566
  %v1631 = vadd.f32 %v1243, %v1567
  %v1632 = vadd.f32 %v1244, %v1568
  %v1633 = vadd.f32 %v1245, %v1569
  %v1634 = vadd.f32 %v1246, %v1570
  %v1635 = vadd.f32 %v1247, %v1571
  %v1636 = vadd.f32 %v1248, %v1572
  %v1637 = vadd.f32 %v1249, %v1573
  %v1638 = vadd.f32 %v1250, %v1574
  %v1639 = vadd.f32 %v1251, %v1575
  %v1640 = vadd.f32 %v1252, %v1576
  %v1641 = vadd.f32 %v1253, %v1577
  %v1642 = vadd.f32 %v1254, %v1578
  %v1643 = vadd.f32 %v1255, %v1579
  %1644 = vset.pattern.permute.xlu0 4
  %1645 = vperm.xlu0 %1644, %v28
  %v1646 = vpop.permute.xlu0 %1645
  %1648 = vset.pattern.permute.xlu0 4
  %1649 = vperm.xlu0 %1648, %v29
  %v1650 = vpop.permute.xlu0 %1649
  %1652 = vset.pattern.permute.xlu0 4
  %1653 = vperm.xlu0 %1652, %v30
  %v1654 = vpop.permute.xlu0 %1653
  %1656 = vset.pattern.permute.xlu0 4
  %1657 = vperm.xlu0 %1656, %v31
  %v1658 = vpop.permute.xlu0 %1657
  %1660 = vset.pattern.permute.xlu0 4
  %1661 = vperm.xlu0 %1660, %v32
  %v1662 = vpop.permute.xlu0 %1661
  %1664 = vset.pattern.permute.xlu0 4
  %1665 = vperm.xlu0 %1664, %v33
  %v1666 = vpop.permute.xlu0 %1665
  %1668 = vset.pattern.permute.xlu0 4
  %1669 = vperm.xlu0 %1668, %v34
  %v1670 = vpop.permute.xlu0 %1669
  %1672 = vset.pattern.permute.xlu0 4
  %1673 = vperm.xlu0 %1672, %v35
  %v1674 = vpop.permute.xlu0 %1673
  %1676 = vset.pattern.permute.xlu0 4
  %1677 = vperm.xlu0 %1676, %v36
  %v1678 = vpop.permute.xlu0 %1677
  %1680 = vset.pattern.permute.xlu0 4
  %1681 = vperm.xlu0 %1680, %v37
  %v1682 = vpop.permute.xlu0 %1681
  %1684 = vset.pattern.permute.xlu0 4
  %1685 = vperm.xlu0 %1684, %v38
  %v1686 = vpop.permute.xlu0 %1685
  %1688 = vset.pattern.permute.xlu0 4
  %1689 = vperm.xlu0 %1688, %v39
  %v1690 = vpop.permute.xlu0 %1689
  %1692 = vset.pattern.permute.xlu0 4
  %1693 = vperm.xlu0 %1692, %v40
  %v1694 = vpop.permute.xlu0 %1693
  %1696 = vset.pattern.permute.xlu0 4
  %1697 = vperm.xlu0 %1696, %v41
  %v1698 = vpop.permute.xlu0 %1697
  %1700 = vset.pattern.permute.xlu0 4
  %1701 = vperm.xlu0 %1700, %v42
  %v1702 = vpop.permute.xlu0 %1701
  %1704 = vset.pattern.permute.xlu0 4
  %1705 = vperm.xlu0 %1704, %v43
  %v1706 = vpop.permute.xlu0 %1705
  %1708 = vset.pattern.permute.xlu0 4
  %1709 = vperm.xlu0 %1708, %v44
  %v1710 = vpop.permute.xlu0 %1709
  %1712 = vset.pattern.permute.xlu0 4
  %1713 = vperm.xlu0 %1712, %v45
  %v1714 = vpop.permute.xlu0 %1713
  %1716 = vset.pattern.permute.xlu0 4
  %1717 = vperm.xlu0 %1716, %v46
  %v1718 = vpop.permute.xlu0 %1717
  %1720 = vset.pattern.permute.xlu0 4
  %1721 = vperm.xlu0 %1720, %v47
  %v1722 = vpop.permute.xlu0 %1721
  %1724 = vset.pattern.permute.xlu0 4
  %1725 = vperm.xlu0 %1724, %v48
  %v1726 = vpop.permute.xlu0 %1725
  %1728 = vset.pattern.permute.xlu0 4
  %1729 = vperm.xlu0 %1728, %v49
  %v1730 = vpop.permute.xlu0 %1729
  %1732 = vset.pattern.permute.xlu0 4
  %1733 = vperm.xlu0 %1732, %v50
  %v1734 = vpop.permute.xlu0 %1733
  %1736 = vset.pattern.permute.xlu0 4
  %1737 = vperm.xlu0 %1736, %v51
  %v1738 = vpop.permute.xlu0 %1737
  %1740 = vset.pattern.permute.xlu0 4
  %1741 = vperm.xlu0 %1740, %v52
  %v1742 = vpop.permute.xlu0 %1741
  %1744 = vset.pattern.permute.xlu0 4
  %1745 = vperm.xlu0 %1744, %v53
  %v1746 = vpop.permute.xlu0 %1745
  %1748 = vset.pattern.permute.xlu0 4
  %1749 = vperm.xlu0 %1748, %v54
  %v1750 = vpop.permute.xlu0 %1749
  %1752 = vset.pattern.permute.xlu0 4
  %1753 = vperm.xlu0 %1752, %v55
  %v1754 = vpop.permute.xlu0 %1753
  %1756 = vset.pattern.permute.xlu0 4
  %1757 = vperm.xlu0 %1756, %v56
  %v1758 = vpop.permute.xlu0 %1757
  %1760 = vset.pattern.permute.xlu0 4
  %1761 = vperm.xlu0 %1760, %v57
  %v1762 = vpop.permute.xlu0 %1761
  %1764 = vset.pattern.permute.xlu0 4
  %1765 = vperm.xlu0 %1764, %v58
  %v1766 = vpop.permute.xlu0 %1765
  %1768 = vset.pattern.permute.xlu0 4
  %1769 = vperm.xlu0 %1768, %v59
  %v1770 = vpop.permute.xlu0 %1769
  %1772 = vset.pattern.permute.xlu0 4
  %1773 = vperm.xlu0 %1772, %v60
  %v1774 = vpop.permute.xlu0 %1773
  %1776 = vset.pattern.permute.xlu0 4
  %1777 = vperm.xlu0 %1776, %v61
  %v1778 = vpop.permute.xlu0 %1777
  %1780 = vset.pattern.permute.xlu0 4
  %1781 = vperm.xlu0 %1780, %v62
  %v1782 = vpop.permute.xlu0 %1781
  %1784 = vset.pattern.permute.xlu0 4
  %1785 = vperm.xlu0 %1784, %v63
  %v1786 = vpop.permute.xlu0 %1785
  %1788 = vset.pattern.permute.xlu0 4
  %1789 = vperm.xlu0 %1788, %v64
  %v1790 = vpop.permute.xlu0 %1789
  %1792 = vset.pattern.permute.xlu0 4
  %1793 = vperm.xlu0 %1792, %v65
  %v1794 = vpop.permute.xlu0 %1793
  %1796 = vset.pattern.permute.xlu0 4
  %1797 = vperm.xlu0 %1796, %v66
  %v1798 = vpop.permute.xlu0 %1797
  %1800 = vset.pattern.permute.xlu0 4
  %1801 = vperm.xlu0 %1800, %v67
  %v1802 = vpop.permute.xlu0 %1801
  %1804 = vset.pattern.permute.xlu0 4
  %1805 = vperm.xlu0 %1804, %v68
  %v1806 = vpop.permute.xlu0 %1805
  %1808 = vset.pattern.permute.xlu0 4
  %1809 = vperm.xlu0 %1808, %v69
  %v1810 = vpop.permute.xlu0 %1809
  %1812 = vset.pattern.permute.xlu0 4
  %1813 = vperm.xlu0 %1812, %v70
  %v1814 = vpop.permute.xlu0 %1813
  %1816 = vset.pattern.permute.xlu0 4
  %1817 = vperm.xlu0 %1816, %v71
  %v1818 = vpop.permute.xlu0 %1817
  %1820 = vset.pattern.permute.xlu0 4
  %1821 = vperm.xlu0 %1820, %v72
  %v1822 = vpop.permute.xlu0 %1821
  %1824 = vset.pattern.permute.xlu0 4
  %1825 = vperm.xlu0 %1824, %v73
  %v1826 = vpop.permute.xlu0 %1825
  %1828 = vset.pattern.permute.xlu0 4
  %1829 = vperm.xlu0 %1828, %v74
  %v1830 = vpop.permute.xlu0 %1829
  %1832 = vset.pattern.permute.xlu0 4
  %1833 = vperm.xlu0 %1832, %v75
  %v1834 = vpop.permute.xlu0 %1833
  %1836 = vset.pattern.permute.xlu0 4
  %1837 = vperm.xlu0 %1836, %v76
  %v1838 = vpop.permute.xlu0 %1837
  %1840 = vset.pattern.permute.xlu0 4
  %1841 = vperm.xlu0 %1840, %v77
  %v1842 = vpop.permute.xlu0 %1841
  %1844 = vset.pattern.permute.xlu0 4
  %1845 = vperm.xlu0 %1844, %v78
  %v1846 = vpop.permute.xlu0 %1845
  %1848 = vset.pattern.permute.xlu0 4
  %1849 = vperm.xlu0 %1848, %v79
  %v1850 = vpop.permute.xlu0 %1849
  %1852 = vset.pattern.permute.xlu0 4
  %1853 = vperm.xlu0 %1852, %v80
  %v1854 = vpop.permute.xlu0 %1853
  %1856 = vset.pattern.permute.xlu0 4
  %1857 = vperm.xlu0 %1856, %v81
  %v1858 = vpop.permute.xlu0 %1857
  %1860 = vset.pattern.permute.xlu0 4
  %1861 = vperm.xlu0 %1860, %v82
  %v1862 = vpop.permute.xlu0 %1861
  %1864 = vset.pattern.permute.xlu0 4
  %1865 = vperm.xlu0 %1864, %v83
  %v1866 = vpop.permute.xlu0 %1865
  %1868 = vset.pattern.permute.xlu0 4
  %1869 = vperm.xlu0 %1868, %v84
  %v1870 = vpop.permute.xlu0 %1869
  %1872 = vset.pattern.permute.xlu0 4
  %1873 = vperm.xlu0 %1872, %v85
  %v1874 = vpop.permute.xlu0 %1873
  %1876 = vset.pattern.permute.xlu0 4
  %1877 = vperm.xlu0 %1876, %v86
  %v1878 = vpop.permute.xlu0 %1877
  %1880 = vset.pattern.permute.xlu0 4
  %1881 = vperm.xlu0 %1880, %v87
  %v1882 = vpop.permute.xlu0 %1881
  %1884 = vset.pattern.permute.xlu0 4
  %1885 = vperm.xlu0 %1884, %v88
  %v1886 = vpop.permute.xlu0 %1885
  %1888 = vset.pattern.permute.xlu0 4
  %1889 = vperm.xlu0 %1888, %v89
  %v1890 = vpop.permute.xlu0 %1889
  %1892 = vset.pattern.permute.xlu0 4
  %1893 = vperm.xlu0 %1892, %v90
  %v1894 = vpop.permute.xlu0 %1893
  %1896 = vset.pattern.permute.xlu0 4
  %1897 = vperm.xlu0 %1896, %v91
  %v1898 = vpop.permute.xlu0 %1897
  %v1900 = vlaneseq
  %v1901 = vshrl.u32 %v1900, 7
  %v1902 = vsub.s32 4, %v1901
  %v1903 = vrot.slane %v27, %v1902
  %v1904 = vmul.f32 %v1646, %v1903
  %v1905 = vmul.f32 %v1650, %v1903
  %v1906 = vmul.f32 %v1654, %v1903
  %v1907 = vmul.f32 %v1658, %v1903
  %v1908 = vmul.f32 %v1662, %v1903
  %v1909 = vmul.f32 %v1666, %v1903
  %v1910 = vmul.f32 %v1670, %v1903
  %v1911 = vmul.f32 %v1674, %v1903
  %v1912 = vmul.f32 %v1678, %v1903
  %v1913 = vmul.f32 %v1682, %v1903
  %v1914 = vmul.f32 %v1686, %v1903
  %v1915 = vmul.f32 %v1690, %v1903
  %v1916 = vmul.f32 %v1694, %v1903
  %v1917 = vmul.f32 %v1698, %v1903
  %v1918 = vmul.f32 %v1702, %v1903
  %v1919 = vmul.f32 %v1706, %v1903
  %v1920 = vmul.f32 %v1710, %v1903
  %v1921 = vmul.f32 %v1714, %v1903
  %v1922 = vmul.f32 %v1718, %v1903
  %v1923 = vmul.f32 %v1722, %v1903
  %v1924 = vmul.f32 %v1726, %v1903
  %v1925 = vmul.f32 %v1730, %v1903
  %v1926 = vmul.f32 %v1734, %v1903
  %v1927 = vmul.f32 %v1738, %v1903
  %v1928 = vmul.f32 %v1742, %v1903
  %v1929 = vmul.f32 %v1746, %v1903
  %v1930 = vmul.f32 %v1750, %v1903
  %v1931 = vmul.f32 %v1754, %v1903
  %v1932 = vmul.f32 %v1758, %v1903
  %v1933 = vmul.f32 %v1762, %v1903
  %v1934 = vmul.f32 %v1766, %v1903
  %v1935 = vmul.f32 %v1770, %v1903
  %v1936 = vmul.f32 %v1774, %v1903
  %v1937 = vmul.f32 %v1778, %v1903
  %v1938 = vmul.f32 %v1782, %v1903
  %v1939 = vmul.f32 %v1786, %v1903
  %v1940 = vmul.f32 %v1790, %v1903
  %v1941 = vmul.f32 %v1794, %v1903
  %v1942 = vmul.f32 %v1798, %v1903
  %v1943 = vmul.f32 %v1802, %v1903
  %v1944 = vmul.f32 %v1806, %v1903
  %v1945 = vmul.f32 %v1810, %v1903
  %v1946 = vmul.f32 %v1814, %v1903
  %v1947 = vmul.f32 %v1818, %v1903
  %v1948 = vmul.f32 %v1822, %v1903
  %v1949 = vmul.f32 %v1826, %v1903
  %v1950 = vmul.f32 %v1830, %v1903
  %v1951 = vmul.f32 %v1834, %v1903
  %v1952 = vmul.f32 %v1838, %v1903
  %v1953 = vmul.f32 %v1842, %v1903
  %v1954 = vmul.f32 %v1846, %v1903
  %v1955 = vmul.f32 %v1850, %v1903
  %v1956 = vmul.f32 %v1854, %v1903
  %v1957 = vmul.f32 %v1858, %v1903
  %v1958 = vmul.f32 %v1862, %v1903
  %v1959 = vmul.f32 %v1866, %v1903
  %v1960 = vmul.f32 %v1870, %v1903
  %v1961 = vmul.f32 %v1874, %v1903
  %v1962 = vmul.f32 %v1878, %v1903
  %v1963 = vmul.f32 %v1882, %v1903
  %v1964 = vmul.f32 %v1886, %v1903
  %v1965 = vmul.f32 %v1890, %v1903
  %v1966 = vmul.f32 %v1894, %v1903
  %v1967 = vmul.f32 %v1898, %v1903
  %v1968 = vadd.f32 %v1580, %v1904
  %v1969 = vadd.f32 %v1581, %v1905
  %v1970 = vadd.f32 %v1582, %v1906
  %v1971 = vadd.f32 %v1583, %v1907
  %v1972 = vadd.f32 %v1584, %v1908
  %v1973 = vadd.f32 %v1585, %v1909
  %v1974 = vadd.f32 %v1586, %v1910
  %v1975 = vadd.f32 %v1587, %v1911
  %v1976 = vadd.f32 %v1588, %v1912
  %v1977 = vadd.f32 %v1589, %v1913
  %v1978 = vadd.f32 %v1590, %v1914
  %v1979 = vadd.f32 %v1591, %v1915
  %v1980 = vadd.f32 %v1592, %v1916
  %v1981 = vadd.f32 %v1593, %v1917
  %v1982 = vadd.f32 %v1594, %v1918
  %v1983 = vadd.f32 %v1595, %v1919
  %v1984 = vadd.f32 %v1596, %v1920
  %v1985 = vadd.f32 %v1597, %v1921
  %v1986 = vadd.f32 %v1598, %v1922
  %v1987 = vadd.f32 %v1599, %v1923
  %v1988 = vadd.f32 %v1600, %v1924
  %v1989 = vadd.f32 %v1601, %v1925
  %v1990 = vadd.f32 %v1602, %v1926
  %v1991 = vadd.f32 %v1603, %v1927
  %v1992 = vadd.f32 %v1604, %v1928
  %v1993 = vadd.f32 %v1605, %v1929
  %v1994 = vadd.f32 %v1606, %v1930
  %v1995 = vadd.f32 %v1607, %v1931
  %v1996 = vadd.f32 %v1608, %v1932
  %v1997 = vadd.f32 %v1609, %v1933
  %v1998 = vadd.f32 %v1610, %v1934
  %v1999 = vadd.f32 %v1611, %v1935
  %v2000 = vadd.f32 %v1612, %v1936
  %v2001 = vadd.f32 %v1613, %v1937
  %v2002 = vadd.f32 %v1614, %v1938
  %v2003 = vadd.f32 %v1615, %v1939
  %v2004 = vadd.f32 %v1616, %v1940
  %v2005 = vadd.f32 %v1617, %v1941
  %v2006 = vadd.f32 %v1618, %v1942
  %v2007 = vadd.f32 %v1619, %v1943
  %v2008 = vadd.f32 %v1620, %v1944
  %v2009 = vadd.f32 %v1621, %v1945
  %v2010 = vadd.f32 %v1622, %v1946
  %v2011 = vadd.f32 %v1623, %v1947
  %v2012 = vadd.f32 %v1624, %v1948
  %v2013 = vadd.f32 %v1625, %v1949
  %v2014 = vadd.f32 %v1626, %v1950
  %v2015 = vadd.f32 %v1627, %v1951
  %v2016 = vadd.f32 %v1628, %v1952
  %v2017 = vadd.f32 %v1629, %v1953
  %v2018 = vadd.f32 %v1630, %v1954
  %v2019 = vadd.f32 %v1631, %v1955
  %v2020 = vadd.f32 %v1632, %v1956
  %v2021 = vadd.f32 %v1633, %v1957
  %v2022 = vadd.f32 %v1634, %v1958
  %v2023 = vadd.f32 %v1635, %v1959
  %v2024 = vadd.f32 %v1636, %v1960
  %v2025 = vadd.f32 %v1637, %v1961
  %v2026 = vadd.f32 %v1638, %v1962
  %v2027 = vadd.f32 %v1639, %v1963
  %v2028 = vadd.f32 %v1640, %v1964
  %v2029 = vadd.f32 %v1641, %v1965
  %v2030 = vadd.f32 %v1642, %v1966
  %v2031 = vadd.f32 %v1643, %v1967
  %v2032 = vld [vmem:[%s2] sm:$0xff]
  %v2033 = vld [vmem:[%s2 + $0x8] sm:$0xff]
  %v2034 = vld [vmem:[%s2 + $0x10] sm:$0xff]
  %v2035 = vld [vmem:[%s2 + $0x18] sm:$0xff]
  %v2036 = vld [vmem:[%s2 + $0x20] sm:$0xff]
  %v2037 = vld [vmem:[%s2 + $0x28] sm:$0xff]
  %v2038 = vld [vmem:[%s2 + $0x30] sm:$0xff]
  %v2039 = vld [vmem:[%s2 + $0x38] sm:$0xff]
  %v2040 = vld [vmem:[%s2 + $0x40] sm:$0xff]
  %v2041 = vld [vmem:[%s2 + $0x48] sm:$0xff]
  %v2042 = vld [vmem:[%s2 + $0x50] sm:$0xff]
  %v2043 = vld [vmem:[%s2 + $0x58] sm:$0xff]
  %v2044 = vld [vmem:[%s2 + $0x60] sm:$0xff]
  %v2045 = vld [vmem:[%s2 + $0x68] sm:$0xff]
  %v2046 = vld [vmem:[%s2 + $0x70] sm:$0xff]
  %v2047 = vld [vmem:[%s2 + $0x78] sm:$0xff]
  %v2048 = vld [vmem:[%s2 + $0x80] sm:$0xff]
  %v2049 = vld [vmem:[%s2 + $0x88] sm:$0xff]
  %v2050 = vld [vmem:[%s2 + $0x90] sm:$0xff]
  %v2051 = vld [vmem:[%s2 + $0x98] sm:$0xff]
  %v2052 = vld [vmem:[%s2 + $0xa0] sm:$0xff]
  %v2053 = vld [vmem:[%s2 + $0xa8] sm:$0xff]
  %v2054 = vld [vmem:[%s2 + $0xb0] sm:$0xff]
  %v2055 = vld [vmem:[%s2 + $0xb8] sm:$0xff]
  %v2056 = vld [vmem:[%s2 + $0xc0] sm:$0xff]
  %v2057 = vld [vmem:[%s2 + $0xc8] sm:$0xff]
  %v2058 = vld [vmem:[%s2 + $0xd0] sm:$0xff]
  %v2059 = vld [vmem:[%s2 + $0xd8] sm:$0xff]
  %v2060 = vld [vmem:[%s2 + $0xe0] sm:$0xff]
  %v2061 = vld [vmem:[%s2 + $0xe8] sm:$0xff]
  %v2062 = vld [vmem:[%s2 + $0xf0] sm:$0xff]
  %v2063 = vld [vmem:[%s2 + $0xf8] sm:$0xff]
  %v2064 = vld [vmem:[%s2 + $0x100] sm:$0xff]
  %v2065 = vld [vmem:[%s2 + $0x108] sm:$0xff]
  %v2066 = vld [vmem:[%s2 + $0x110] sm:$0xff]
  %v2067 = vld [vmem:[%s2 + $0x118] sm:$0xff]
  %v2068 = vld [vmem:[%s2 + $0x120] sm:$0xff]
  %v2069 = vld [vmem:[%s2 + $0x128] sm:$0xff]
  %v2070 = vld [vmem:[%s2 + $0x130] sm:$0xff]
  %v2071 = vld [vmem:[%s2 + $0x138] sm:$0xff]
  %v2072 = vld [vmem:[%s2 + $0x140] sm:$0xff]
  %v2073 = vld [vmem:[%s2 + $0x148] sm:$0xff]
  %v2074 = vld [vmem:[%s2 + $0x150] sm:$0xff]
  %v2075 = vld [vmem:[%s2 + $0x158] sm:$0xff]
  %v2076 = vld [vmem:[%s2 + $0x160] sm:$0xff]
  %v2077 = vld [vmem:[%s2 + $0x168] sm:$0xff]
  %v2078 = vld [vmem:[%s2 + $0x170] sm:$0xff]
  %v2079 = vld [vmem:[%s2 + $0x178] sm:$0xff]
  %v2080 = vld [vmem:[%s2 + $0x180] sm:$0xff]
  %v2081 = vld [vmem:[%s2 + $0x188] sm:$0xff]
  %v2082 = vld [vmem:[%s2 + $0x190] sm:$0xff]
  %v2083 = vld [vmem:[%s2 + $0x198] sm:$0xff]
  %v2084 = vld [vmem:[%s2 + $0x1a0] sm:$0xff]
  %v2085 = vld [vmem:[%s2 + $0x1a8] sm:$0xff]
  %v2086 = vld [vmem:[%s2 + $0x1b0] sm:$0xff]
  %v2087 = vld [vmem:[%s2 + $0x1b8] sm:$0xff]
  %v2088 = vld [vmem:[%s2 + $0x1c0] sm:$0xff]
  %v2089 = vld [vmem:[%s2 + $0x1c8] sm:$0xff]
  %v2090 = vld [vmem:[%s2 + $0x1d0] sm:$0xff]
  %v2091 = vld [vmem:[%s2 + $0x1d8] sm:$0xff]
  %v2092 = vld [vmem:[%s2 + $0x1e0] sm:$0xff]
  %v2093 = vld [vmem:[%s2 + $0x1e8] sm:$0xff]
  %v2094 = vld [vmem:[%s2 + $0x1f0] sm:$0xff]
  %v2095 = vld [vmem:[%s2 + $0x1f8] sm:$0xff]
  %2097 = vset.pattern.permute.xlu0 0
  %2098 = vperm.xlu0 %2097, %v2032
  %v2099 = vpop.permute.xlu0 %2098
  %2102 = vset.pattern.permute.xlu0 0
  %2103 = vperm.xlu0 %2102, %v2033
  %v2104 = vpop.permute.xlu0 %2103
  %2107 = vset.pattern.permute.xlu0 0
  %2108 = vperm.xlu0 %2107, %v2034
  %v2109 = vpop.permute.xlu0 %2108
  %2112 = vset.pattern.permute.xlu0 0
  %2113 = vperm.xlu0 %2112, %v2035
  %v2114 = vpop.permute.xlu0 %2113
  %2117 = vset.pattern.permute.xlu0 0
  %2118 = vperm.xlu0 %2117, %v2036
  %v2119 = vpop.permute.xlu0 %2118
  %2122 = vset.pattern.permute.xlu0 0
  %2123 = vperm.xlu0 %2122, %v2037
  %v2124 = vpop.permute.xlu0 %2123
  %2127 = vset.pattern.permute.xlu0 0
  %2128 = vperm.xlu0 %2127, %v2038
  %v2129 = vpop.permute.xlu0 %2128
  %2132 = vset.pattern.permute.xlu0 0
  %2133 = vperm.xlu0 %2132, %v2039
  %v2134 = vpop.permute.xlu0 %2133
  %2137 = vset.pattern.permute.xlu0 0
  %2138 = vperm.xlu0 %2137, %v2040
  %v2139 = vpop.permute.xlu0 %2138
  %2142 = vset.pattern.permute.xlu0 0
  %2143 = vperm.xlu0 %2142, %v2041
  %v2144 = vpop.permute.xlu0 %2143
  %2147 = vset.pattern.permute.xlu0 0
  %2148 = vperm.xlu0 %2147, %v2042
  %v2149 = vpop.permute.xlu0 %2148
  %2152 = vset.pattern.permute.xlu0 0
  %2153 = vperm.xlu0 %2152, %v2043
  %v2154 = vpop.permute.xlu0 %2153
  %2157 = vset.pattern.permute.xlu0 0
  %2158 = vperm.xlu0 %2157, %v2044
  %v2159 = vpop.permute.xlu0 %2158
  %2162 = vset.pattern.permute.xlu0 0
  %2163 = vperm.xlu0 %2162, %v2045
  %v2164 = vpop.permute.xlu0 %2163
  %2167 = vset.pattern.permute.xlu0 0
  %2168 = vperm.xlu0 %2167, %v2046
  %v2169 = vpop.permute.xlu0 %2168
  %2172 = vset.pattern.permute.xlu0 0
  %2173 = vperm.xlu0 %2172, %v2047
  %v2174 = vpop.permute.xlu0 %2173
  %2177 = vset.pattern.permute.xlu0 0
  %2178 = vperm.xlu0 %2177, %v2048
  %v2179 = vpop.permute.xlu0 %2178
  %2182 = vset.pattern.permute.xlu0 0
  %2183 = vperm.xlu0 %2182, %v2049
  %v2184 = vpop.permute.xlu0 %2183
  %2187 = vset.pattern.permute.xlu0 0
  %2188 = vperm.xlu0 %2187, %v2050
  %v2189 = vpop.permute.xlu0 %2188
  %2192 = vset.pattern.permute.xlu0 0
  %2193 = vperm.xlu0 %2192, %v2051
  %v2194 = vpop.permute.xlu0 %2193
  %2197 = vset.pattern.permute.xlu0 0
  %2198 = vperm.xlu0 %2197, %v2052
  %v2199 = vpop.permute.xlu0 %2198
  %2202 = vset.pattern.permute.xlu0 0
  %2203 = vperm.xlu0 %2202, %v2053
  %v2204 = vpop.permute.xlu0 %2203
  %2207 = vset.pattern.permute.xlu0 0
  %2208 = vperm.xlu0 %2207, %v2054
  %v2209 = vpop.permute.xlu0 %2208
  %2212 = vset.pattern.permute.xlu0 0
  %2213 = vperm.xlu0 %2212, %v2055
  %v2214 = vpop.permute.xlu0 %2213
  %2217 = vset.pattern.permute.xlu0 0
  %2218 = vperm.xlu0 %2217, %v2056
  %v2219 = vpop.permute.xlu0 %2218
  %2222 = vset.pattern.permute.xlu0 0
  %2223 = vperm.xlu0 %2222, %v2057
  %v2224 = vpop.permute.xlu0 %2223
  %2227 = vset.pattern.permute.xlu0 0
  %2228 = vperm.xlu0 %2227, %v2058
  %v2229 = vpop.permute.xlu0 %2228
  %2232 = vset.pattern.permute.xlu0 0
  %2233 = vperm.xlu0 %2232, %v2059
  %v2234 = vpop.permute.xlu0 %2233
  %2237 = vset.pattern.permute.xlu0 0
  %2238 = vperm.xlu0 %2237, %v2060
  %v2239 = vpop.permute.xlu0 %2238
  %2242 = vset.pattern.permute.xlu0 0
  %2243 = vperm.xlu0 %2242, %v2061
  %v2244 = vpop.permute.xlu0 %2243
  %2247 = vset.pattern.permute.xlu0 0
  %2248 = vperm.xlu0 %2247, %v2062
  %v2249 = vpop.permute.xlu0 %2248
  %2252 = vset.pattern.permute.xlu0 0
  %2253 = vperm.xlu0 %2252, %v2063
  %v2254 = vpop.permute.xlu0 %2253
  %2257 = vset.pattern.permute.xlu0 0
  %2258 = vperm.xlu0 %2257, %v2064
  %v2259 = vpop.permute.xlu0 %2258
  %2262 = vset.pattern.permute.xlu0 0
  %2263 = vperm.xlu0 %2262, %v2065
  %v2264 = vpop.permute.xlu0 %2263
  %2267 = vset.pattern.permute.xlu0 0
  %2268 = vperm.xlu0 %2267, %v2066
  %v2269 = vpop.permute.xlu0 %2268
  %2272 = vset.pattern.permute.xlu0 0
  %2273 = vperm.xlu0 %2272, %v2067
  %v2274 = vpop.permute.xlu0 %2273
  %2277 = vset.pattern.permute.xlu0 0
  %2278 = vperm.xlu0 %2277, %v2068
  %v2279 = vpop.permute.xlu0 %2278
  %2282 = vset.pattern.permute.xlu0 0
  %2283 = vperm.xlu0 %2282, %v2069
  %v2284 = vpop.permute.xlu0 %2283
  %2287 = vset.pattern.permute.xlu0 0
  %2288 = vperm.xlu0 %2287, %v2070
  %v2289 = vpop.permute.xlu0 %2288
  %2292 = vset.pattern.permute.xlu0 0
  %2293 = vperm.xlu0 %2292, %v2071
  %v2294 = vpop.permute.xlu0 %2293
  %2297 = vset.pattern.permute.xlu0 0
  %2298 = vperm.xlu0 %2297, %v2072
  %v2299 = vpop.permute.xlu0 %2298
  %2302 = vset.pattern.permute.xlu0 0
  %2303 = vperm.xlu0 %2302, %v2073
  %v2304 = vpop.permute.xlu0 %2303
  %2307 = vset.pattern.permute.xlu0 0
  %2308 = vperm.xlu0 %2307, %v2074
  %v2309 = vpop.permute.xlu0 %2308
  %2312 = vset.pattern.permute.xlu0 0
  %2313 = vperm.xlu0 %2312, %v2075
  %v2314 = vpop.permute.xlu0 %2313
  %2317 = vset.pattern.permute.xlu0 0
  %2318 = vperm.xlu0 %2317, %v2076
  %v2319 = vpop.permute.xlu0 %2318
  %2322 = vset.pattern.permute.xlu0 0
  %2323 = vperm.xlu0 %2322, %v2077
  %v2324 = vpop.permute.xlu0 %2323
  %2327 = vset.pattern.permute.xlu0 0
  %2328 = vperm.xlu0 %2327, %v2078
  %v2329 = vpop.permute.xlu0 %2328
  %2332 = vset.pattern.permute.xlu0 0
  %2333 = vperm.xlu0 %2332, %v2079
  %v2334 = vpop.permute.xlu0 %2333
  %2337 = vset.pattern.permute.xlu0 0
  %2338 = vperm.xlu0 %2337, %v2080
  %v2339 = vpop.permute.xlu0 %2338
  %2342 = vset.pattern.permute.xlu0 0
  %2343 = vperm.xlu0 %2342, %v2081
  %v2344 = vpop.permute.xlu0 %2343
  %2347 = vset.pattern.permute.xlu0 0
  %2348 = vperm.xlu0 %2347, %v2082
  %v2349 = vpop.permute.xlu0 %2348
  %2352 = vset.pattern.permute.xlu0 0
  %2353 = vperm.xlu0 %2352, %v2083
  %v2354 = vpop.permute.xlu0 %2353
  %2357 = vset.pattern.permute.xlu0 0
  %2358 = vperm.xlu0 %2357, %v2084
  %v2359 = vpop.permute.xlu0 %2358
  %2362 = vset.pattern.permute.xlu0 0
  %2363 = vperm.xlu0 %2362, %v2085
  %v2364 = vpop.permute.xlu0 %2363
  %2367 = vset.pattern.permute.xlu0 0
  %2368 = vperm.xlu0 %2367, %v2086
  %v2369 = vpop.permute.xlu0 %2368
  %2372 = vset.pattern.permute.xlu0 0
  %2373 = vperm.xlu0 %2372, %v2087
  %v2374 = vpop.permute.xlu0 %2373
  %2377 = vset.pattern.permute.xlu0 0
  %2378 = vperm.xlu0 %2377, %v2088
  %v2379 = vpop.permute.xlu0 %2378
  %2382 = vset.pattern.permute.xlu0 0
  %2383 = vperm.xlu0 %2382, %v2089
  %v2384 = vpop.permute.xlu0 %2383
  %2387 = vset.pattern.permute.xlu0 0
  %2388 = vperm.xlu0 %2387, %v2090
  %v2389 = vpop.permute.xlu0 %2388
  %2392 = vset.pattern.permute.xlu0 0
  %2393 = vperm.xlu0 %2392, %v2091
  %v2394 = vpop.permute.xlu0 %2393
  %2397 = vset.pattern.permute.xlu0 0
  %2398 = vperm.xlu0 %2397, %v2092
  %v2399 = vpop.permute.xlu0 %2398
  %2402 = vset.pattern.permute.xlu0 0
  %2403 = vperm.xlu0 %2402, %v2093
  %v2404 = vpop.permute.xlu0 %2403
  %2407 = vset.pattern.permute.xlu0 0
  %2408 = vperm.xlu0 %2407, %v2094
  %v2409 = vpop.permute.xlu0 %2408
  %2412 = vset.pattern.permute.xlu0 0
  %2413 = vperm.xlu0 %2412, %v2095
  %v2414 = vpop.permute.xlu0 %2413
  %v2416 = vadd.f32 %v1968, %v2099
  %v2417 = vadd.f32 %v1969, %v2104
  %v2418 = vadd.f32 %v1970, %v2109
  %v2419 = vadd.f32 %v1971, %v2114
  %v2420 = vadd.f32 %v1972, %v2119
  %v2421 = vadd.f32 %v1973, %v2124
  %v2422 = vadd.f32 %v1974, %v2129
  %v2423 = vadd.f32 %v1975, %v2134
  %v2424 = vadd.f32 %v1976, %v2139
  %v2425 = vadd.f32 %v1977, %v2144
  %v2426 = vadd.f32 %v1978, %v2149
  %v2427 = vadd.f32 %v1979, %v2154
  %v2428 = vadd.f32 %v1980, %v2159
  %v2429 = vadd.f32 %v1981, %v2164
  %v2430 = vadd.f32 %v1982, %v2169
  %v2431 = vadd.f32 %v1983, %v2174
  %v2432 = vadd.f32 %v1984, %v2179
  %v2433 = vadd.f32 %v1985, %v2184
  %v2434 = vadd.f32 %v1986, %v2189
  %v2435 = vadd.f32 %v1987, %v2194
  %v2436 = vadd.f32 %v1988, %v2199
  %v2437 = vadd.f32 %v1989, %v2204
  %v2438 = vadd.f32 %v1990, %v2209
  %v2439 = vadd.f32 %v1991, %v2214
  %v2440 = vadd.f32 %v1992, %v2219
  %v2441 = vadd.f32 %v1993, %v2224
  %v2442 = vadd.f32 %v1994, %v2229
  %v2443 = vadd.f32 %v1995, %v2234
  %v2444 = vadd.f32 %v1996, %v2239
  %v2445 = vadd.f32 %v1997, %v2244
  %v2446 = vadd.f32 %v1998, %v2249
  %v2447 = vadd.f32 %v1999, %v2254
  %v2448 = vadd.f32 %v2000, %v2259
  %v2449 = vadd.f32 %v2001, %v2264
  %v2450 = vadd.f32 %v2002, %v2269
  %v2451 = vadd.f32 %v2003, %v2274
  %v2452 = vadd.f32 %v2004, %v2279
  %v2453 = vadd.f32 %v2005, %v2284
  %v2454 = vadd.f32 %v2006, %v2289
  %v2455 = vadd.f32 %v2007, %v2294
  %v2456 = vadd.f32 %v2008, %v2299
  %v2457 = vadd.f32 %v2009, %v2304
  %v2458 = vadd.f32 %v2010, %v2309
  %v2459 = vadd.f32 %v2011, %v2314
  %v2460 = vadd.f32 %v2012, %v2319
  %v2461 = vadd.f32 %v2013, %v2324
  %v2462 = vadd.f32 %v2014, %v2329
  %v2463 = vadd.f32 %v2015, %v2334
  %v2464 = vadd.f32 %v2016, %v2339
  %v2465 = vadd.f32 %v2017, %v2344
  %v2466 = vadd.f32 %v2018, %v2349
  %v2467 = vadd.f32 %v2019, %v2354
  %v2468 = vadd.f32 %v2020, %v2359
  %v2469 = vadd.f32 %v2021, %v2364
  %v2470 = vadd.f32 %v2022, %v2369
  %v2471 = vadd.f32 %v2023, %v2374
  %v2472 = vadd.f32 %v2024, %v2379
  %v2473 = vadd.f32 %v2025, %v2384
  %v2474 = vadd.f32 %v2026, %v2389
  %v2475 = vadd.f32 %v2027, %v2394
  %v2476 = vadd.f32 %v2028, %v2399
  %v2477 = vadd.f32 %v2029, %v2404
  %v2478 = vadd.f32 %v2030, %v2409
  %v2479 = vadd.f32 %v2031, %v2414
  %v2480 = vxor.u32 %v2416, 2147483648
  %v2481 = vxor.u32 %v2417, 2147483648
  %v2482 = vxor.u32 %v2418, 2147483648
  %v2483 = vxor.u32 %v2419, 2147483648
  %v2484 = vxor.u32 %v2420, 2147483648
  %v2485 = vxor.u32 %v2421, 2147483648
  %v2486 = vxor.u32 %v2422, 2147483648
  %v2487 = vxor.u32 %v2423, 2147483648
  %v2488 = vxor.u32 %v2424, 2147483648
  %v2489 = vxor.u32 %v2425, 2147483648
  %v2490 = vxor.u32 %v2426, 2147483648
  %v2491 = vxor.u32 %v2427, 2147483648
  %v2492 = vxor.u32 %v2428, 2147483648
  %v2493 = vxor.u32 %v2429, 2147483648
  %v2494 = vxor.u32 %v2430, 2147483648
  %v2495 = vxor.u32 %v2431, 2147483648
  %v2496 = vxor.u32 %v2432, 2147483648
  %v2497 = vxor.u32 %v2433, 2147483648
  %v2498 = vxor.u32 %v2434, 2147483648
  %v2499 = vxor.u32 %v2435, 2147483648
  %v2500 = vxor.u32 %v2436, 2147483648
  %v2501 = vxor.u32 %v2437, 2147483648
  %v2502 = vxor.u32 %v2438, 2147483648
  %v2503 = vxor.u32 %v2439, 2147483648
  %v2504 = vxor.u32 %v2440, 2147483648
  %v2505 = vxor.u32 %v2441, 2147483648
  %v2506 = vxor.u32 %v2442, 2147483648
  %v2507 = vxor.u32 %v2443, 2147483648
  %v2508 = vxor.u32 %v2444, 2147483648
  %v2509 = vxor.u32 %v2445, 2147483648
  %v2510 = vxor.u32 %v2446, 2147483648
  %v2511 = vxor.u32 %v2447, 2147483648
  %v2512 = vxor.u32 %v2448, 2147483648
  %v2513 = vxor.u32 %v2449, 2147483648
  %v2514 = vxor.u32 %v2450, 2147483648
  %v2515 = vxor.u32 %v2451, 2147483648
  %v2516 = vxor.u32 %v2452, 2147483648
  %v2517 = vxor.u32 %v2453, 2147483648
  %v2518 = vxor.u32 %v2454, 2147483648
  %v2519 = vxor.u32 %v2455, 2147483648
  %v2520 = vxor.u32 %v2456, 2147483648
  %v2521 = vxor.u32 %v2457, 2147483648
  %v2522 = vxor.u32 %v2458, 2147483648
  %v2523 = vxor.u32 %v2459, 2147483648
  %v2524 = vxor.u32 %v2460, 2147483648
  %v2525 = vxor.u32 %v2461, 2147483648
  %v2526 = vxor.u32 %v2462, 2147483648
  %v2527 = vxor.u32 %v2463, 2147483648
  %v2528 = vxor.u32 %v2464, 2147483648
  %v2529 = vxor.u32 %v2465, 2147483648
  %v2530 = vxor.u32 %v2466, 2147483648
  %v2531 = vxor.u32 %v2467, 2147483648
  %v2532 = vxor.u32 %v2468, 2147483648
  %v2533 = vxor.u32 %v2469, 2147483648
  %v2534 = vxor.u32 %v2470, 2147483648
  %v2535 = vxor.u32 %v2471, 2147483648
  %v2536 = vxor.u32 %v2472, 2147483648
  %v2537 = vxor.u32 %v2473, 2147483648
  %v2538 = vxor.u32 %v2474, 2147483648
  %v2539 = vxor.u32 %v2475, 2147483648
  %v2540 = vxor.u32 %v2476, 2147483648
  %v2541 = vxor.u32 %v2477, 2147483648
  %v2542 = vxor.u32 %v2478, 2147483648
  %v2543 = vxor.u32 %v2479, 2147483648
  %v2544 = vmul.f32 %v2480, 1.442695
  %v2545 = vpow.pop %v2544
  %v2546 = vmul.f32 %v2481, 1.442695
  %v2547 = vpow.pop %v2546
  %v2548 = vmul.f32 %v2482, 1.442695
  %v2549 = vpow.pop %v2548
  %v2550 = vmul.f32 %v2483, 1.442695
  %v2551 = vpow.pop %v2550
  %v2552 = vmul.f32 %v2484, 1.442695
  %v2553 = vpow.pop %v2552
  %v2554 = vmul.f32 %v2485, 1.442695
  %v2555 = vpow.pop %v2554
  %v2556 = vmul.f32 %v2486, 1.442695
  %v2557 = vpow.pop %v2556
  %v2558 = vmul.f32 %v2487, 1.442695
  %v2559 = vpow.pop %v2558
  %v2560 = vmul.f32 %v2488, 1.442695
  %v2561 = vpow.pop %v2560
  %v2562 = vmul.f32 %v2489, 1.442695
  %v2563 = vpow.pop %v2562
  %v2564 = vmul.f32 %v2490, 1.442695
  %v2565 = vpow.pop %v2564
  %v2566 = vmul.f32 %v2491, 1.442695
  %v2567 = vpow.pop %v2566
  %v2568 = vmul.f32 %v2492, 1.442695
  %v2569 = vpow.pop %v2568
  %v2570 = vmul.f32 %v2493, 1.442695
  %v2571 = vpow.pop %v2570
  %v2572 = vmul.f32 %v2494, 1.442695
  %v2573 = vpow.pop %v2572
  %v2574 = vmul.f32 %v2495, 1.442695
  %v2575 = vpow.pop %v2574
  %v2576 = vmul.f32 %v2496, 1.442695
  %v2577 = vpow.pop %v2576
  %v2578 = vmul.f32 %v2497, 1.442695
  %v2579 = vpow.pop %v2578
  %v2580 = vmul.f32 %v2498, 1.442695
  %v2581 = vpow.pop %v2580
  %v2582 = vmul.f32 %v2499, 1.442695
  %v2583 = vpow.pop %v2582
  %v2584 = vmul.f32 %v2500, 1.442695
  %v2585 = vpow.pop %v2584
  %v2586 = vmul.f32 %v2501, 1.442695
  %v2587 = vpow.pop %v2586
  %v2588 = vmul.f32 %v2502, 1.442695
  %v2589 = vpow.pop %v2588
  %v2590 = vmul.f32 %v2503, 1.442695
  %v2591 = vpow.pop %v2590
  %v2592 = vmul.f32 %v2504, 1.442695
  %v2593 = vpow.pop %v2592
  %v2594 = vmul.f32 %v2505, 1.442695
  %v2595 = vpow.pop %v2594
  %v2596 = vmul.f32 %v2506, 1.442695
  %v2597 = vpow.pop %v2596
  %v2598 = vmul.f32 %v2507, 1.442695
  %v2599 = vpow.pop %v2598
  %v2600 = vmul.f32 %v2508, 1.442695
  %v2601 = vpow.pop %v2600
  %v2602 = vmul.f32 %v2509, 1.442695
  %v2603 = vpow.pop %v2602
  %v2604 = vmul.f32 %v2510, 1.442695
  %v2605 = vpow.pop %v2604
  %v2606 = vmul.f32 %v2511, 1.442695
  %v2607 = vpow.pop %v2606
  %v2608 = vmul.f32 %v2512, 1.442695
  %v2609 = vpow.pop %v2608
  %v2610 = vmul.f32 %v2513, 1.442695
  %v2611 = vpow.pop %v2610
  %v2612 = vmul.f32 %v2514, 1.442695
  %v2613 = vpow.pop %v2612
  %v2614 = vmul.f32 %v2515, 1.442695
  %v2615 = vpow.pop %v2614
  %v2616 = vmul.f32 %v2516, 1.442695
  %v2617 = vpow.pop %v2616
  %v2618 = vmul.f32 %v2517, 1.442695
  %v2619 = vpow.pop %v2618
  %v2620 = vmul.f32 %v2518, 1.442695
  %v2621 = vpow.pop %v2620
  %v2622 = vmul.f32 %v2519, 1.442695
  %v2623 = vpow.pop %v2622
  %v2624 = vmul.f32 %v2520, 1.442695
  %v2625 = vpow.pop %v2624
  %v2626 = vmul.f32 %v2521, 1.442695
  %v2627 = vpow.pop %v2626
  %v2628 = vmul.f32 %v2522, 1.442695
  %v2629 = vpow.pop %v2628
  %v2630 = vmul.f32 %v2523, 1.442695
  %v2631 = vpow.pop %v2630
  %v2632 = vmul.f32 %v2524, 1.442695
  %v2633 = vpow.pop %v2632
  %v2634 = vmul.f32 %v2525, 1.442695
  %v2635 = vpow.pop %v2634
  %v2636 = vmul.f32 %v2526, 1.442695
  %v2637 = vpow.pop %v2636
  %v2638 = vmul.f32 %v2527, 1.442695
  %v2639 = vpow.pop %v2638
  %v2640 = vmul.f32 %v2528, 1.442695
  %v2641 = vpow.pop %v2640
  %v2642 = vmul.f32 %v2529, 1.442695
  %v2643 = vpow.pop %v2642
  %v2644 = vmul.f32 %v2530, 1.442695
  %v2645 = vpow.pop %v2644
  %v2646 = vmul.f32 %v2531, 1.442695
  %v2647 = vpow.pop %v2646
  %v2648 = vmul.f32 %v2532, 1.442695
  %v2649 = vpow.pop %v2648
  %v2650 = vmul.f32 %v2533, 1.442695
  %v2651 = vpow.pop %v2650
  %v2652 = vmul.f32 %v2534, 1.442695
  %v2653 = vpow.pop %v2652
  %v2654 = vmul.f32 %v2535, 1.442695
  %v2655 = vpow.pop %v2654
  %v2656 = vmul.f32 %v2536, 1.442695
  %v2657 = vpow.pop %v2656
  %v2658 = vmul.f32 %v2537, 1.442695
  %v2659 = vpow.pop %v2658
  %v2660 = vmul.f32 %v2538, 1.442695
  %v2661 = vpow.pop %v2660
  %v2662 = vmul.f32 %v2539, 1.442695
  %v2663 = vpow.pop %v2662
  %v2664 = vmul.f32 %v2540, 1.442695
  %v2665 = vpow.pop %v2664
  %v2666 = vmul.f32 %v2541, 1.442695
  %v2667 = vpow.pop %v2666
  %v2668 = vmul.f32 %v2542, 1.442695
  %v2669 = vpow.pop %v2668
  %v2670 = vmul.f32 %v2543, 1.442695
  %v2671 = vpow.pop %v2670
  %v2672 = vadd.f32 %v2545, 1.0
  %v2673 = vadd.f32 %v2547, 1.0
  %v2674 = vadd.f32 %v2549, 1.0
  %v2675 = vadd.f32 %v2551, 1.0
  %v2676 = vadd.f32 %v2553, 1.0
  %v2677 = vadd.f32 %v2555, 1.0
  %v2678 = vadd.f32 %v2557, 1.0
  %v2679 = vadd.f32 %v2559, 1.0
  %v2680 = vadd.f32 %v2561, 1.0
  %v2681 = vadd.f32 %v2563, 1.0
  %v2682 = vadd.f32 %v2565, 1.0
  %v2683 = vadd.f32 %v2567, 1.0
  %v2684 = vadd.f32 %v2569, 1.0
  %v2685 = vadd.f32 %v2571, 1.0
  %v2686 = vadd.f32 %v2573, 1.0
  %v2687 = vadd.f32 %v2575, 1.0
  %v2688 = vadd.f32 %v2577, 1.0
  %v2689 = vadd.f32 %v2579, 1.0
  %v2690 = vadd.f32 %v2581, 1.0
  %v2691 = vadd.f32 %v2583, 1.0
  %v2692 = vadd.f32 %v2585, 1.0
  %v2693 = vadd.f32 %v2587, 1.0
  %v2694 = vadd.f32 %v2589, 1.0
  %v2695 = vadd.f32 %v2591, 1.0
  %v2696 = vadd.f32 %v2593, 1.0
  %v2697 = vadd.f32 %v2595, 1.0
  %v2698 = vadd.f32 %v2597, 1.0
  %v2699 = vadd.f32 %v2599, 1.0
  %v2700 = vadd.f32 %v2601, 1.0
  %v2701 = vadd.f32 %v2603, 1.0
  %v2702 = vadd.f32 %v2605, 1.0
  %v2703 = vadd.f32 %v2607, 1.0
  %v2704 = vadd.f32 %v2609, 1.0
  %v2705 = vadd.f32 %v2611, 1.0
  %v2706 = vadd.f32 %v2613, 1.0
  %v2707 = vadd.f32 %v2615, 1.0
  %v2708 = vadd.f32 %v2617, 1.0
  %v2709 = vadd.f32 %v2619, 1.0
  %v2710 = vadd.f32 %v2621, 1.0
  %v2711 = vadd.f32 %v2623, 1.0
  %v2712 = vadd.f32 %v2625, 1.0
  %v2713 = vadd.f32 %v2627, 1.0
  %v2714 = vadd.f32 %v2629, 1.0
  %v2715 = vadd.f32 %v2631, 1.0
  %v2716 = vadd.f32 %v2633, 1.0
  %v2717 = vadd.f32 %v2635, 1.0
  %v2718 = vadd.f32 %v2637, 1.0
  %v2719 = vadd.f32 %v2639, 1.0
  %v2720 = vadd.f32 %v2641, 1.0
  %v2721 = vadd.f32 %v2643, 1.0
  %v2722 = vadd.f32 %v2645, 1.0
  %v2723 = vadd.f32 %v2647, 1.0
  %v2724 = vadd.f32 %v2649, 1.0
  %v2725 = vadd.f32 %v2651, 1.0
  %v2726 = vadd.f32 %v2653, 1.0
  %v2727 = vadd.f32 %v2655, 1.0
  %v2728 = vadd.f32 %v2657, 1.0
  %v2729 = vadd.f32 %v2659, 1.0
  %v2730 = vadd.f32 %v2661, 1.0
  %v2731 = vadd.f32 %v2663, 1.0
  %v2732 = vadd.f32 %v2665, 1.0
  %v2733 = vadd.f32 %v2667, 1.0
  %v2734 = vadd.f32 %v2669, 1.0
  %v2735 = vadd.f32 %v2671, 1.0
  %v2736 = vrcp.pop %v2672
  %v2737 = vmul.f32 1.0, %v2736
  %v2738 = vrcp.pop %v2673
  %v2739 = vmul.f32 1.0, %v2738
  %v2740 = vrcp.pop %v2674
  %v2741 = vmul.f32 1.0, %v2740
  %v2742 = vrcp.pop %v2675
  %v2743 = vmul.f32 1.0, %v2742
  %v2744 = vrcp.pop %v2676
  %v2745 = vmul.f32 1.0, %v2744
  %v2746 = vrcp.pop %v2677
  %v2747 = vmul.f32 1.0, %v2746
  %v2748 = vrcp.pop %v2678
  %v2749 = vmul.f32 1.0, %v2748
  %v2750 = vrcp.pop %v2679
  %v2751 = vmul.f32 1.0, %v2750
  %v2752 = vrcp.pop %v2680
  %v2753 = vmul.f32 1.0, %v2752
  %v2754 = vrcp.pop %v2681
  %v2755 = vmul.f32 1.0, %v2754
  %v2756 = vrcp.pop %v2682
  %v2757 = vmul.f32 1.0, %v2756
  %v2758 = vrcp.pop %v2683
  %v2759 = vmul.f32 1.0, %v2758
  %v2760 = vrcp.pop %v2684
  %v2761 = vmul.f32 1.0, %v2760
  %v2762 = vrcp.pop %v2685
  %v2763 = vmul.f32 1.0, %v2762
  %v2764 = vrcp.pop %v2686
  %v2765 = vmul.f32 1.0, %v2764
  %v2766 = vrcp.pop %v2687
  %v2767 = vmul.f32 1.0, %v2766
  %v2768 = vrcp.pop %v2688
  %v2769 = vmul.f32 1.0, %v2768
  %v2770 = vrcp.pop %v2689
  %v2771 = vmul.f32 1.0, %v2770
  %v2772 = vrcp.pop %v2690
  %v2773 = vmul.f32 1.0, %v2772
  %v2774 = vrcp.pop %v2691
  %v2775 = vmul.f32 1.0, %v2774
  %v2776 = vrcp.pop %v2692
  %v2777 = vmul.f32 1.0, %v2776
  %v2778 = vrcp.pop %v2693
  %v2779 = vmul.f32 1.0, %v2778
  %v2780 = vrcp.pop %v2694
  %v2781 = vmul.f32 1.0, %v2780
  %v2782 = vrcp.pop %v2695
  %v2783 = vmul.f32 1.0, %v2782
  %v2784 = vrcp.pop %v2696
  %v2785 = vmul.f32 1.0, %v2784
  %v2786 = vrcp.pop %v2697
  %v2787 = vmul.f32 1.0, %v2786
  %v2788 = vrcp.pop %v2698
  %v2789 = vmul.f32 1.0, %v2788
  %v2790 = vrcp.pop %v2699
  %v2791 = vmul.f32 1.0, %v2790
  %v2792 = vrcp.pop %v2700
  %v2793 = vmul.f32 1.0, %v2792
  %v2794 = vrcp.pop %v2701
  %v2795 = vmul.f32 1.0, %v2794
  %v2796 = vrcp.pop %v2702
  %v2797 = vmul.f32 1.0, %v2796
  %v2798 = vrcp.pop %v2703
  %v2799 = vmul.f32 1.0, %v2798
  %v2800 = vrcp.pop %v2704
  %v2801 = vmul.f32 1.0, %v2800
  %v2802 = vrcp.pop %v2705
  %v2803 = vmul.f32 1.0, %v2802
  %v2804 = vrcp.pop %v2706
  %v2805 = vmul.f32 1.0, %v2804
  %v2806 = vrcp.pop %v2707
  %v2807 = vmul.f32 1.0, %v2806
  %v2808 = vrcp.pop %v2708
  %v2809 = vmul.f32 1.0, %v2808
  %v2810 = vrcp.pop %v2709
  %v2811 = vmul.f32 1.0, %v2810
  %v2812 = vrcp.pop %v2710
  %v2813 = vmul.f32 1.0, %v2812
  %v2814 = vrcp.pop %v2711
  %v2815 = vmul.f32 1.0, %v2814
  %v2816 = vrcp.pop %v2712
  %v2817 = vmul.f32 1.0, %v2816
  %v2818 = vrcp.pop %v2713
  %v2819 = vmul.f32 1.0, %v2818
  %v2820 = vrcp.pop %v2714
  %v2821 = vmul.f32 1.0, %v2820
  %v2822 = vrcp.pop %v2715
  %v2823 = vmul.f32 1.0, %v2822
  %v2824 = vrcp.pop %v2716
  %v2825 = vmul.f32 1.0, %v2824
  %v2826 = vrcp.pop %v2717
  %v2827 = vmul.f32 1.0, %v2826
  %v2828 = vrcp.pop %v2718
  %v2829 = vmul.f32 1.0, %v2828
  %v2830 = vrcp.pop %v2719
  %v2831 = vmul.f32 1.0, %v2830
  %v2832 = vrcp.pop %v2720
  %v2833 = vmul.f32 1.0, %v2832
  %v2834 = vrcp.pop %v2721
  %v2835 = vmul.f32 1.0, %v2834
  %v2836 = vrcp.pop %v2722
  %v2837 = vmul.f32 1.0, %v2836
  %v2838 = vrcp.pop %v2723
  %v2839 = vmul.f32 1.0, %v2838
  %v2840 = vrcp.pop %v2724
  %v2841 = vmul.f32 1.0, %v2840
  %v2842 = vrcp.pop %v2725
  %v2843 = vmul.f32 1.0, %v2842
  %v2844 = vrcp.pop %v2726
  %v2845 = vmul.f32 1.0, %v2844
  %v2846 = vrcp.pop %v2727
  %v2847 = vmul.f32 1.0, %v2846
  %v2848 = vrcp.pop %v2728
  %v2849 = vmul.f32 1.0, %v2848
  %v2850 = vrcp.pop %v2729
  %v2851 = vmul.f32 1.0, %v2850
  %v2852 = vrcp.pop %v2730
  %v2853 = vmul.f32 1.0, %v2852
  %v2854 = vrcp.pop %v2731
  %v2855 = vmul.f32 1.0, %v2854
  %v2856 = vrcp.pop %v2732
  %v2857 = vmul.f32 1.0, %v2856
  %v2858 = vrcp.pop %v2733
  %v2859 = vmul.f32 1.0, %v2858
  %v2860 = vrcp.pop %v2734
  %v2861 = vmul.f32 1.0, %v2860
  %v2862 = vrcp.pop %v2735
  %v2863 = vmul.f32 1.0, %v2862
  %v2864 = vld [vmem:[%s3] sm:$0xff]
  %v2865 = vld [vmem:[%s3 + $0x8] sm:$0xff]
  %v2866 = vld [vmem:[%s3 + $0x10] sm:$0xff]
  %v2867 = vld [vmem:[%s3 + $0x18] sm:$0xff]
  %v2868 = vld [vmem:[%s3 + $0x20] sm:$0xff]
  %v2869 = vld [vmem:[%s3 + $0x28] sm:$0xff]
  %v2870 = vld [vmem:[%s3 + $0x30] sm:$0xff]
  %v2871 = vld [vmem:[%s3 + $0x38] sm:$0xff]
  %v2872 = vld [vmem:[%s3 + $0x40] sm:$0xff]
  %v2873 = vld [vmem:[%s3 + $0x48] sm:$0xff]
  %v2874 = vld [vmem:[%s3 + $0x50] sm:$0xff]
  %v2875 = vld [vmem:[%s3 + $0x58] sm:$0xff]
  %v2876 = vld [vmem:[%s3 + $0x60] sm:$0xff]
  %v2877 = vld [vmem:[%s3 + $0x68] sm:$0xff]
  %v2878 = vld [vmem:[%s3 + $0x70] sm:$0xff]
  %v2879 = vld [vmem:[%s3 + $0x78] sm:$0xff]
  %v2880 = vld [vmem:[%s3 + $0x80] sm:$0xff]
  %v2881 = vld [vmem:[%s3 + $0x88] sm:$0xff]
  %v2882 = vld [vmem:[%s3 + $0x90] sm:$0xff]
  %v2883 = vld [vmem:[%s3 + $0x98] sm:$0xff]
  %v2884 = vld [vmem:[%s3 + $0xa0] sm:$0xff]
  %v2885 = vld [vmem:[%s3 + $0xa8] sm:$0xff]
  %v2886 = vld [vmem:[%s3 + $0xb0] sm:$0xff]
  %v2887 = vld [vmem:[%s3 + $0xb8] sm:$0xff]
  %v2888 = vld [vmem:[%s3 + $0xc0] sm:$0xff]
  %v2889 = vld [vmem:[%s3 + $0xc8] sm:$0xff]
  %v2890 = vld [vmem:[%s3 + $0xd0] sm:$0xff]
  %v2891 = vld [vmem:[%s3 + $0xd8] sm:$0xff]
  %v2892 = vld [vmem:[%s3 + $0xe0] sm:$0xff]
  %v2893 = vld [vmem:[%s3 + $0xe8] sm:$0xff]
  %v2894 = vld [vmem:[%s3 + $0xf0] sm:$0xff]
  %v2895 = vld [vmem:[%s3 + $0xf8] sm:$0xff]
  %v2896 = vpack.c.bf16 %v2739, %v2737
  %v2897 = vpack.c.bf16 %v2743, %v2741
  %v2898 = vpack.c.bf16 %v2747, %v2745
  %v2899 = vpack.c.bf16 %v2751, %v2749
  %v2900 = vpack.c.bf16 %v2755, %v2753
  %v2901 = vpack.c.bf16 %v2759, %v2757
  %v2902 = vpack.c.bf16 %v2763, %v2761
  %v2903 = vpack.c.bf16 %v2767, %v2765
  %v2904 = vpack.c.bf16 %v2771, %v2769
  %v2905 = vpack.c.bf16 %v2775, %v2773
  %v2906 = vpack.c.bf16 %v2779, %v2777
  %v2907 = vpack.c.bf16 %v2783, %v2781
  %v2908 = vpack.c.bf16 %v2787, %v2785
  %v2909 = vpack.c.bf16 %v2791, %v2789
  %v2910 = vpack.c.bf16 %v2795, %v2793
  %v2911 = vpack.c.bf16 %v2799, %v2797
  %v2912 = vpack.c.bf16 %v2803, %v2801
  %v2913 = vpack.c.bf16 %v2807, %v2805
  %v2914 = vpack.c.bf16 %v2811, %v2809
  %v2915 = vpack.c.bf16 %v2815, %v2813
  %v2916 = vpack.c.bf16 %v2819, %v2817
  %v2917 = vpack.c.bf16 %v2823, %v2821
  %v2918 = vpack.c.bf16 %v2827, %v2825
  %v2919 = vpack.c.bf16 %v2831, %v2829
  %v2920 = vpack.c.bf16 %v2835, %v2833
  %v2921 = vpack.c.bf16 %v2839, %v2837
  %v2922 = vpack.c.bf16 %v2843, %v2841
  %v2923 = vpack.c.bf16 %v2847, %v2845
  %v2924 = vpack.c.bf16 %v2851, %v2849
  %v2925 = vpack.c.bf16 %v2855, %v2853
  %v2926 = vpack.c.bf16 %v2859, %v2857
  %v2927 = vpack.c.bf16 %v2863, %v2861
  %v2928 = vld [vmem:[%s4] sm:$0xff]
  %v2929 = vld [vmem:[%s4 + $0x8] sm:$0xff]
  %v2930 = vld [vmem:[%s4 + $0x10] sm:$0xff]
  %v2931 = vld [vmem:[%s4 + $0x18] sm:$0xff]
  %v2932 = vld [vmem:[%s4 + $0x20] sm:$0xff]
  %v2933 = vld [vmem:[%s4 + $0x28] sm:$0xff]
  %v2934 = vld [vmem:[%s4 + $0x30] sm:$0xff]
  %v2935 = vld [vmem:[%s4 + $0x38] sm:$0xff]
  %v2936 = vld [vmem:[%s4 + $0x40] sm:$0xff]
  %v2937 = vld [vmem:[%s4 + $0x48] sm:$0xff]
  %v2938 = vld [vmem:[%s4 + $0x50] sm:$0xff]
  %v2939 = vld [vmem:[%s4 + $0x58] sm:$0xff]
  %v2940 = vld [vmem:[%s4 + $0x60] sm:$0xff]
  %v2941 = vld [vmem:[%s4 + $0x68] sm:$0xff]
  %v2942 = vld [vmem:[%s4 + $0x70] sm:$0xff]
  %v2943 = vld [vmem:[%s4 + $0x78] sm:$0xff]
  %2945 = vset.pattern.permute.xlu0 0
  %2946 = vperm.xlu0 %2945, %v2928
  %v2947 = vpop.permute.xlu0 %2946
  %2950 = vset.pattern.permute.xlu0 0
  %2951 = vperm.xlu0 %2950, %v2929
  %v2952 = vpop.permute.xlu0 %2951
  %2955 = vset.pattern.permute.xlu0 0
  %2956 = vperm.xlu0 %2955, %v2930
  %v2957 = vpop.permute.xlu0 %2956
  %2960 = vset.pattern.permute.xlu0 0
  %2961 = vperm.xlu0 %2960, %v2931
  %v2962 = vpop.permute.xlu0 %2961
  %2965 = vset.pattern.permute.xlu0 0
  %2966 = vperm.xlu0 %2965, %v2932
  %v2967 = vpop.permute.xlu0 %2966
  %2970 = vset.pattern.permute.xlu0 0
  %2971 = vperm.xlu0 %2970, %v2933
  %v2972 = vpop.permute.xlu0 %2971
  %2975 = vset.pattern.permute.xlu0 0
  %2976 = vperm.xlu0 %2975, %v2934
  %v2977 = vpop.permute.xlu0 %2976
  %2980 = vset.pattern.permute.xlu0 0
  %2981 = vperm.xlu0 %2980, %v2935
  %v2982 = vpop.permute.xlu0 %2981
  %2985 = vset.pattern.permute.xlu0 0
  %2986 = vperm.xlu0 %2985, %v2936
  %v2987 = vpop.permute.xlu0 %2986
  %2990 = vset.pattern.permute.xlu0 0
  %2991 = vperm.xlu0 %2990, %v2937
  %v2992 = vpop.permute.xlu0 %2991
  %2995 = vset.pattern.permute.xlu0 0
  %2996 = vperm.xlu0 %2995, %v2938
  %v2997 = vpop.permute.xlu0 %2996
  %3000 = vset.pattern.permute.xlu0 0
  %3001 = vperm.xlu0 %3000, %v2939
  %v3002 = vpop.permute.xlu0 %3001
  %3005 = vset.pattern.permute.xlu0 0
  %3006 = vperm.xlu0 %3005, %v2940
  %v3007 = vpop.permute.xlu0 %3006
  %3010 = vset.pattern.permute.xlu0 0
  %3011 = vperm.xlu0 %3010, %v2941
  %v3012 = vpop.permute.xlu0 %3011
  %3015 = vset.pattern.permute.xlu0 0
  %3016 = vperm.xlu0 %3015, %v2942
  %v3017 = vpop.permute.xlu0 %3016
  %3020 = vset.pattern.permute.xlu0 0
  %3021 = vperm.xlu0 %3020, %v2943
  %v3022 = vpop.permute.xlu0 %3021
  %v3056 = vunpack.c.l.b16 %v2864
  %v3057 = vunpack.c.h.b16 %v2864
  %v3058 = vunpack.c.l.b16 %v2865
  %v3059 = vunpack.c.h.b16 %v2865
  %v3060 = vunpack.c.l.b16 %v2866
  %v3061 = vunpack.c.h.b16 %v2866
  %v3062 = vunpack.c.l.b16 %v2867
  %v3063 = vunpack.c.h.b16 %v2867
  %v3064 = vunpack.c.l.b16 %v2868
  %v3065 = vunpack.c.h.b16 %v2868
  %v3066 = vunpack.c.l.b16 %v2869
  %v3067 = vunpack.c.h.b16 %v2869
  %v3068 = vunpack.c.l.b16 %v2870
  %v3069 = vunpack.c.h.b16 %v2870
  %v3070 = vunpack.c.l.b16 %v2871
  %v3071 = vunpack.c.h.b16 %v2871
  %v3072 = vunpack.c.l.b16 %v2872
  %v3073 = vunpack.c.h.b16 %v2872
  %v3074 = vunpack.c.l.b16 %v2873
  %v3075 = vunpack.c.h.b16 %v2873
  %v3076 = vunpack.c.l.b16 %v2874
  %v3077 = vunpack.c.h.b16 %v2874
  %v3078 = vunpack.c.l.b16 %v2875
  %v3079 = vunpack.c.h.b16 %v2875
  %v3080 = vunpack.c.l.b16 %v2876
  %v3081 = vunpack.c.h.b16 %v2876
  %v3082 = vunpack.c.l.b16 %v2877
  %v3083 = vunpack.c.h.b16 %v2877
  %v3084 = vunpack.c.l.b16 %v2878
  %v3085 = vunpack.c.h.b16 %v2878
  %v3086 = vunpack.c.l.b16 %v2879
  %v3087 = vunpack.c.h.b16 %v2879
  %v3088 = vunpack.c.l.b16 %v2880
  %v3089 = vunpack.c.h.b16 %v2880
  %v3090 = vunpack.c.l.b16 %v2881
  %v3091 = vunpack.c.h.b16 %v2881
  %v3092 = vunpack.c.l.b16 %v2882
  %v3093 = vunpack.c.h.b16 %v2882
  %v3094 = vunpack.c.l.b16 %v2883
  %v3095 = vunpack.c.h.b16 %v2883
  %v3096 = vunpack.c.l.b16 %v2884
  %v3097 = vunpack.c.h.b16 %v2884
  %v3098 = vunpack.c.l.b16 %v2885
  %v3099 = vunpack.c.h.b16 %v2885
  %v3100 = vunpack.c.l.b16 %v2886
  %v3101 = vunpack.c.h.b16 %v2886
  %v3102 = vunpack.c.l.b16 %v2887
  %v3103 = vunpack.c.h.b16 %v2887
  %v3104 = vunpack.c.l.b16 %v2888
  %v3105 = vunpack.c.h.b16 %v2888
  %v3106 = vunpack.c.l.b16 %v2889
  %v3107 = vunpack.c.h.b16 %v2889
  %v3108 = vunpack.c.l.b16 %v2890
  %v3109 = vunpack.c.h.b16 %v2890
  %v3110 = vunpack.c.l.b16 %v2891
  %v3111 = vunpack.c.h.b16 %v2891
  %v3112 = vunpack.c.l.b16 %v2892
  %v3113 = vunpack.c.h.b16 %v2892
  %v3114 = vunpack.c.l.b16 %v2893
  %v3115 = vunpack.c.h.b16 %v2893
  %v3116 = vunpack.c.l.b16 %v2894
  %v3117 = vunpack.c.h.b16 %v2894
  %v3118 = vunpack.c.l.b16 %v2895
  %v3119 = vunpack.c.h.b16 %v2895
  %v3120 = vpack.c.b16 %v3060, %v3056
  %v3121 = vpack.c.b16 %v3061, %v3057
  %v3122 = vpack.c.b16 %v3062, %v3058
  %v3123 = vpack.c.b16 %v3063, %v3059
  %v3124 = vpack.c.b16 %v3068, %v3064
  %v3125 = vpack.c.b16 %v3069, %v3065
  %v3126 = vpack.c.b16 %v3070, %v3066
  %v3127 = vpack.c.b16 %v3071, %v3067
  %v3128 = vpack.c.b16 %v3076, %v3072
  %v3129 = vpack.c.b16 %v3077, %v3073
  %v3130 = vpack.c.b16 %v3078, %v3074
  %v3131 = vpack.c.b16 %v3079, %v3075
  %v3132 = vpack.c.b16 %v3084, %v3080
  %v3133 = vpack.c.b16 %v3085, %v3081
  %v3134 = vpack.c.b16 %v3086, %v3082
  %v3135 = vpack.c.b16 %v3087, %v3083
  %v3136 = vpack.c.b16 %v3092, %v3088
  %v3137 = vpack.c.b16 %v3093, %v3089
  %v3138 = vpack.c.b16 %v3094, %v3090
  %v3139 = vpack.c.b16 %v3095, %v3091
  %v3140 = vpack.c.b16 %v3100, %v3096
  %v3141 = vpack.c.b16 %v3101, %v3097
  %v3142 = vpack.c.b16 %v3102, %v3098
  %v3143 = vpack.c.b16 %v3103, %v3099
  %v3144 = vpack.c.b16 %v3108, %v3104
  %v3145 = vpack.c.b16 %v3109, %v3105
  %v3146 = vpack.c.b16 %v3110, %v3106
  %v3147 = vpack.c.b16 %v3111, %v3107
  %v3148 = vpack.c.b16 %v3116, %v3112
  %v3149 = vpack.c.b16 %v3117, %v3113
  %v3150 = vpack.c.b16 %v3118, %v3114
  %v3151 = vpack.c.b16 %v3119, %v3115
  %3184 = vmatprep.subr.bf16.mxu0 0
  %3185 = vmatpush1.bf16.msra.mxu0 %v2896
  %3186 = vmatprep.subr.bf16.mxu0 0
  %3187 = vmatpush1.bf16.msra.mxu0 %v2897
  %3188 = vmatprep.subr.bf16.mxu0 0
  %3189 = vmatpush1.bf16.msra.mxu0 %v2898
  %3190 = vmatprep.subr.bf16.mxu0 0
  %3191 = vmatpush1.bf16.msra.mxu0 %v2899
  %3192 = vmatprep.subr.bf16.mxu0 0
  %3193 = vmatpush1.bf16.msra.mxu0 %v2900
  %3194 = vmatprep.subr.bf16.mxu0 0
  %3195 = vmatpush1.bf16.msra.mxu0 %v2901
  %3196 = vmatprep.subr.bf16.mxu0 0
  %3197 = vmatpush1.bf16.msra.mxu0 %v2902
  %3198 = vmatprep.subr.bf16.mxu0 0
  %3199 = vmatpush1.bf16.msra.mxu0 %v2903
  %3200 = vmatprep.subr.bf16.mxu0 0
  %3201 = vmatpush1.bf16.msra.mxu0 %v2904
  %3202 = vmatprep.subr.bf16.mxu0 0
  %3203 = vmatpush1.bf16.msra.mxu0 %v2905
  %3204 = vmatprep.subr.bf16.mxu0 0
  %3205 = vmatpush1.bf16.msra.mxu0 %v2906
  %3206 = vmatprep.subr.bf16.mxu0 0
  %3207 = vmatpush1.bf16.msra.mxu0 %v2907
  %3208 = vmatprep.subr.bf16.mxu0 0
  %3209 = vmatpush1.bf16.msra.mxu0 %v2908
  %3210 = vmatprep.subr.bf16.mxu0 0
  %3211 = vmatpush1.bf16.msra.mxu0 %v2909
  %3212 = vmatprep.subr.bf16.mxu0 0
  %3213 = vmatpush1.bf16.msra.mxu0 %v2910
  %3214 = vmatprep.subr.bf16.mxu0 0
  %3215 = vmatpush1.bf16.msra.mxu0 %v2911
  %3216 = vmatprep.mubr.bf16.mxu0 %v3121
  %3217 = vmatmul.mubr.bf16.gmra.mrb[0].mxu0 %v3120
  %v3218 = vpop.f32.mrb[0].mxu0
  %v3219 = vadd.f32 %v2947, %v3218
  %v3220 = vpop.f32.mrb[0].mxu0
  %v3221 = vpop.f32.mrb[0].mxu0
  %v3222 = vadd.f32 %v2952, %v3221
  %v3223 = vpop.f32.mrb[0].mxu0
  %3224 = vmatprep.mubr.bf16.mxu0 %v3125
  %3225 = vmatmul.mubr.bf16.gmra.mrb[0].mxu0 %v3124
  %v3226 = vpop.f32.mrb[0].mxu0
  %v3227 = vadd.f32 %v2957, %v3226
  %v3228 = vpop.f32.mrb[0].mxu0
  %v3229 = vpop.f32.mrb[0].mxu0
  %v3230 = vadd.f32 %v2962, %v3229
  %v3231 = vpop.f32.mrb[0].mxu0
  %3232 = vmatprep.mubr.bf16.mxu0 %v3129
  %3233 = vmatmul.mubr.bf16.gmra.mrb[0].mxu0 %v3128
  %v3234 = vpop.f32.mrb[0].mxu0
  %v3235 = vadd.f32 %v2967, %v3234
  %v3236 = vpop.f32.mrb[0].mxu0
  %v3237 = vpop.f32.mrb[0].mxu0
  %v3238 = vadd.f32 %v2972, %v3237
  %v3239 = vpop.f32.mrb[0].mxu0
  %3240 = vmatprep.mubr.bf16.mxu0 %v3133
  %3241 = vmatmul.mubr.bf16.gmra.mrb[0].mxu0 %v3132
  %v3242 = vpop.f32.mrb[0].mxu0
  %v3243 = vadd.f32 %v2977, %v3242
  %v3244 = vpop.f32.mrb[0].mxu0
  %v3245 = vpop.f32.mrb[0].mxu0
  %v3246 = vadd.f32 %v2982, %v3245
  %v3247 = vpop.f32.mrb[0].mxu0
  %3248 = vmatprep.mubr.bf16.mxu0 %v3137
  %3249 = vmatmul.mubr.bf16.gmra.mrb[0].mxu0 %v3136
  %v3250 = vpop.f32.mrb[0].mxu0
  %v3251 = vadd.f32 %v2987, %v3250
  %v3252 = vpop.f32.mrb[0].mxu0
  %v3253 = vpop.f32.mrb[0].mxu0
  %v3254 = vadd.f32 %v2992, %v3253
  %v3255 = vpop.f32.mrb[0].mxu0
  %3256 = vmatprep.mubr.bf16.mxu0 %v3141
  %3257 = vmatmul.mubr.bf16.gmra.mrb[0].mxu0 %v3140
  %v3258 = vpop.f32.mrb[0].mxu0
  %v3259 = vadd.f32 %v2997, %v3258
  %v3260 = vpop.f32.mrb[0].mxu0
  %v3261 = vpop.f32.mrb[0].mxu0
  %v3262 = vadd.f32 %v3002, %v3261
  %v3263 = vpop.f32.mrb[0].mxu0
  %3264 = vmatprep.mubr.bf16.mxu0 %v3145
  %3265 = vmatmul.mubr.bf16.gmra.mrb[0].mxu0 %v3144
  %v3266 = vpop.f32.mrb[0].mxu0
  %v3267 = vadd.f32 %v3007, %v3266
  %v3268 = vpop.f32.mrb[0].mxu0
  %v3269 = vpop.f32.mrb[0].mxu0
  %v3270 = vadd.f32 %v3012, %v3269
  %v3271 = vpop.f32.mrb[0].mxu0
  %3272 = vmatprep.mubr.bf16.mxu0 %v3149
  %3273 = vmatmul.mubr.bf16.gmra.mrb[0].mxu0 %v3148
  %v3274 = vpop.f32.mrb[0].mxu0
  %v3275 = vadd.f32 %v3017, %v3274
  %v3276 = vpop.f32.mrb[0].mxu0
  %v3277 = vpop.f32.mrb[0].mxu0
  %v3278 = vadd.f32 %v3022, %v3277
  %v3279 = vpop.f32.mrb[0].mxu0
  %3280 = vdwg.mxu0
  %3281 = vmatprep.subr.bf16.mxu0 0
  %3282 = vmatpush1.bf16.msra.mxu0 %v2912
  %3283 = vmatprep.subr.bf16.mxu0 0
  %3284 = vmatpush1.bf16.msra.mxu0 %v2913
  %3285 = vmatprep.subr.bf16.mxu0 0
  %3286 = vmatpush1.bf16.msra.mxu0 %v2914
  %3287 = vmatprep.subr.bf16.mxu0 0
  %3288 = vmatpush1.bf16.msra.mxu0 %v2915
  %3289 = vmatprep.subr.bf16.mxu0 0
  %3290 = vmatpush1.bf16.msra.mxu0 %v2916
  %3291 = vmatprep.subr.bf16.mxu0 0
  %3292 = vmatpush1.bf16.msra.mxu0 %v2917
  %3293 = vmatprep.subr.bf16.mxu0 0
  %3294 = vmatpush1.bf16.msra.mxu0 %v2918
  %3295 = vmatprep.subr.bf16.mxu0 0
  %3296 = vmatpush1.bf16.msra.mxu0 %v2919
  %3297 = vmatprep.subr.bf16.mxu0 0
  %3298 = vmatpush1.bf16.msra.mxu0 %v2920
  %3299 = vmatprep.subr.bf16.mxu0 0
  %3300 = vmatpush1.bf16.msra.mxu0 %v2921
  %3301 = vmatprep.subr.bf16.mxu0 0
  %3302 = vmatpush1.bf16.msra.mxu0 %v2922
  %3303 = vmatprep.subr.bf16.mxu0 0
  %3304 = vmatpush1.bf16.msra.mxu0 %v2923
  %3305 = vmatprep.subr.bf16.mxu0 0
  %3306 = vmatpush1.bf16.msra.mxu0 %v2924
  %3307 = vmatprep.subr.bf16.mxu0 0
  %3308 = vmatpush1.bf16.msra.mxu0 %v2925
  %3309 = vmatprep.subr.bf16.mxu0 0
  %3310 = vmatpush1.bf16.msra.mxu0 %v2926
  %3311 = vmatprep.subr.bf16.mxu0 0
  %3312 = vmatpush1.bf16.msra.mxu0 %v2927
  %3313 = vmatprep.mubr.bf16.mxu0 %v3123
  %3314 = vmatmul.mubr.bf16.gmra.mrb[0].mxu0 %v3122
  %v3315 = vpop.f32.mrb[0].mxu0
  %v3316 = vadd.f32 %v3219, %v3315
  %v3317 = vpop.f32.mrb[0].mxu0
  %v3318 = vpop.f32.mrb[0].mxu0
  %v3319 = vadd.f32 %v3222, %v3318
  %v3320 = vpop.f32.mrb[0].mxu0
  %3321 = vmatprep.mubr.bf16.mxu0 %v3127
  %3322 = vmatmul.mubr.bf16.gmra.mrb[0].mxu0 %v3126
  %v3323 = vpop.f32.mrb[0].mxu0
  %v3324 = vadd.f32 %v3227, %v3323
  %v3325 = vpop.f32.mrb[0].mxu0
  %v3326 = vpop.f32.mrb[0].mxu0
  %v3327 = vadd.f32 %v3230, %v3326
  %v3328 = vpop.f32.mrb[0].mxu0
  %3329 = vmatprep.mubr.bf16.mxu0 %v3131
  %3330 = vmatmul.mubr.bf16.gmra.mrb[0].mxu0 %v3130
  %v3331 = vpop.f32.mrb[0].mxu0
  %v3332 = vadd.f32 %v3235, %v3331
  %v3333 = vpop.f32.mrb[0].mxu0
  %v3334 = vpop.f32.mrb[0].mxu0
  %v3335 = vadd.f32 %v3238, %v3334
  %v3336 = vpop.f32.mrb[0].mxu0
  %3337 = vmatprep.mubr.bf16.mxu0 %v3135
  %3338 = vmatmul.mubr.bf16.gmra.mrb[0].mxu0 %v3134
  %v3339 = vpop.f32.mrb[0].mxu0
  %v3340 = vadd.f32 %v3243, %v3339
  %v3341 = vpop.f32.mrb[0].mxu0
  %v3342 = vpop.f32.mrb[0].mxu0
  %v3343 = vadd.f32 %v3246, %v3342
  %v3344 = vpop.f32.mrb[0].mxu0
  %3345 = vmatprep.mubr.bf16.mxu0 %v3139
  %3346 = vmatmul.mubr.bf16.gmra.mrb[0].mxu0 %v3138
  %v3347 = vpop.f32.mrb[0].mxu0
  %v3348 = vadd.f32 %v3251, %v3347
  %v3349 = vpop.f32.mrb[0].mxu0
  %v3350 = vpop.f32.mrb[0].mxu0
  %v3351 = vadd.f32 %v3254, %v3350
  %v3352 = vpop.f32.mrb[0].mxu0
  %3353 = vmatprep.mubr.bf16.mxu0 %v3143
  %3354 = vmatmul.mubr.bf16.gmra.mrb[0].mxu0 %v3142
  %v3355 = vpop.f32.mrb[0].mxu0
  %v3356 = vadd.f32 %v3259, %v3355
  %v3357 = vpop.f32.mrb[0].mxu0
  %v3358 = vpop.f32.mrb[0].mxu0
  %v3359 = vadd.f32 %v3262, %v3358
  %v3360 = vpop.f32.mrb[0].mxu0
  %3361 = vmatprep.mubr.bf16.mxu0 %v3147
  %3362 = vmatmul.mubr.bf16.gmra.mrb[0].mxu0 %v3146
  %v3363 = vpop.f32.mrb[0].mxu0
  %v3364 = vadd.f32 %v3267, %v3363
  %v3365 = vpop.f32.mrb[0].mxu0
  %v3366 = vpop.f32.mrb[0].mxu0
  %v3367 = vadd.f32 %v3270, %v3366
  %v3368 = vpop.f32.mrb[0].mxu0
  %3369 = vmatprep.mubr.bf16.mxu0 %v3151
  %3370 = vmatmul.mubr.bf16.gmra.mrb[0].mxu0 %v3150
  %v3371 = vpop.f32.mrb[0].mxu0
  %v3372 = vadd.f32 %v3275, %v3371
  %v3373 = vpop.f32.mrb[0].mxu0
  %v3374 = vpop.f32.mrb[0].mxu0
  %v3375 = vadd.f32 %v3278, %v3374
  %v3376 = vpop.f32.mrb[0].mxu0
  %3377 = vdwg.mxu0
  %v3378 = vxor.u32 %v3316, 2147483648
  %v3379 = vxor.u32 %v3319, 2147483648
  %v3380 = vxor.u32 %v3324, 2147483648
  %v3381 = vxor.u32 %v3327, 2147483648
  %v3382 = vxor.u32 %v3332, 2147483648
  %v3383 = vxor.u32 %v3335, 2147483648
  %v3384 = vxor.u32 %v3340, 2147483648
  %v3385 = vxor.u32 %v3343, 2147483648
  %v3386 = vxor.u32 %v3348, 2147483648
  %v3387 = vxor.u32 %v3351, 2147483648
  %v3388 = vxor.u32 %v3356, 2147483648
  %v3389 = vxor.u32 %v3359, 2147483648
  %v3390 = vxor.u32 %v3364, 2147483648
  %v3391 = vxor.u32 %v3367, 2147483648
  %v3392 = vxor.u32 %v3372, 2147483648
  %v3393 = vxor.u32 %v3375, 2147483648
  %v3394 = vmul.f32 %v3378, 1.442695
  %v3395 = vpow.pop %v3394
  %v3396 = vmul.f32 %v3379, 1.442695
  %v3397 = vpow.pop %v3396
  %v3398 = vmul.f32 %v3380, 1.442695
  %v3399 = vpow.pop %v3398
  %v3400 = vmul.f32 %v3381, 1.442695
  %v3401 = vpow.pop %v3400
  %v3402 = vmul.f32 %v3382, 1.442695
  %v3403 = vpow.pop %v3402
  %v3404 = vmul.f32 %v3383, 1.442695
  %v3405 = vpow.pop %v3404
  %v3406 = vmul.f32 %v3384, 1.442695
  %v3407 = vpow.pop %v3406
  %v3408 = vmul.f32 %v3385, 1.442695
  %v3409 = vpow.pop %v3408
  %v3410 = vmul.f32 %v3386, 1.442695
  %v3411 = vpow.pop %v3410
  %v3412 = vmul.f32 %v3387, 1.442695
  %v3413 = vpow.pop %v3412
  %v3414 = vmul.f32 %v3388, 1.442695
  %v3415 = vpow.pop %v3414
  %v3416 = vmul.f32 %v3389, 1.442695
  %v3417 = vpow.pop %v3416
  %v3418 = vmul.f32 %v3390, 1.442695
  %v3419 = vpow.pop %v3418
  %v3420 = vmul.f32 %v3391, 1.442695
  %v3421 = vpow.pop %v3420
  %v3422 = vmul.f32 %v3392, 1.442695
  %v3423 = vpow.pop %v3422
  %v3424 = vmul.f32 %v3393, 1.442695
  %v3425 = vpow.pop %v3424
  %v3426 = vadd.f32 %v3395, 1.0
  %v3427 = vadd.f32 %v3397, 1.0
  %v3428 = vadd.f32 %v3399, 1.0
  %v3429 = vadd.f32 %v3401, 1.0
  %v3430 = vadd.f32 %v3403, 1.0
  %v3431 = vadd.f32 %v3405, 1.0
  %v3432 = vadd.f32 %v3407, 1.0
  %v3433 = vadd.f32 %v3409, 1.0
  %v3434 = vadd.f32 %v3411, 1.0
  %v3435 = vadd.f32 %v3413, 1.0
  %v3436 = vadd.f32 %v3415, 1.0
  %v3437 = vadd.f32 %v3417, 1.0
  %v3438 = vadd.f32 %v3419, 1.0
  %v3439 = vadd.f32 %v3421, 1.0
  %v3440 = vadd.f32 %v3423, 1.0
  %v3441 = vadd.f32 %v3425, 1.0
  %v3442 = vrcp.pop %v3426
  %v3443 = vmul.f32 1.0, %v3442
  %v3444 = vrcp.pop %v3427
  %v3445 = vmul.f32 1.0, %v3444
  %v3446 = vrcp.pop %v3428
  %v3447 = vmul.f32 1.0, %v3446
  %v3448 = vrcp.pop %v3429
  %v3449 = vmul.f32 1.0, %v3448
  %v3450 = vrcp.pop %v3430
  %v3451 = vmul.f32 1.0, %v3450
  %v3452 = vrcp.pop %v3431
  %v3453 = vmul.f32 1.0, %v3452
  %v3454 = vrcp.pop %v3432
  %v3455 = vmul.f32 1.0, %v3454
  %v3456 = vrcp.pop %v3433
  %v3457 = vmul.f32 1.0, %v3456
  %v3458 = vrcp.pop %v3434
  %v3459 = vmul.f32 1.0, %v3458
  %v3460 = vrcp.pop %v3435
  %v3461 = vmul.f32 1.0, %v3460
  %v3462 = vrcp.pop %v3436
  %v3463 = vmul.f32 1.0, %v3462
  %v3464 = vrcp.pop %v3437
  %v3465 = vmul.f32 1.0, %v3464
  %v3466 = vrcp.pop %v3438
  %v3467 = vmul.f32 1.0, %v3466
  %v3468 = vrcp.pop %v3439
  %v3469 = vmul.f32 1.0, %v3468
  %v3470 = vrcp.pop %v3440
  %v3471 = vmul.f32 1.0, %v3470
  %v3472 = vrcp.pop %v3441
  %v3473 = vmul.f32 1.0, %v3472
  %v3474 = vld [vmem:[%s5] sm:$0xf]
  %v3475 = vld [vmem:[%s5 + $0x4] sm:$0xf]
  %v3476 = vld [vmem:[%s5 + $0x8] sm:$0xf]
  %v3477 = vld [vmem:[%s5 + $0xc] sm:$0xf]
  %v3478 = vld [vmem:[%s5 + $0x10] sm:$0xf]
  %v3479 = vld [vmem:[%s5 + $0x14] sm:$0xf]
  %v3480 = vld [vmem:[%s5 + $0x18] sm:$0xf]
  %v3481 = vld [vmem:[%s5 + $0x1c] sm:$0xf]
  %v3482 = vld [vmem:[%s5 + $0x20] sm:$0xf]
  %v3483 = vld [vmem:[%s5 + $0x24] sm:$0xf]
  %v3484 = vld [vmem:[%s5 + $0x28] sm:$0xf]
  %v3485 = vld [vmem:[%s5 + $0x2c] sm:$0xf]
  %v3486 = vld [vmem:[%s5 + $0x30] sm:$0xf]
  %v3487 = vld [vmem:[%s5 + $0x34] sm:$0xf]
  %v3488 = vld [vmem:[%s5 + $0x38] sm:$0xf]
  %v3489 = vld [vmem:[%s5 + $0x3c] sm:$0xf]
  %v3490 = vpack.c.bf16 %v3445, %v3443
  %v3491 = vpack.c.bf16 %v3449, %v3447
  %v3492 = vpack.c.bf16 %v3453, %v3451
  %v3493 = vpack.c.bf16 %v3457, %v3455
  %v3494 = vpack.c.bf16 %v3461, %v3459
  %v3495 = vpack.c.bf16 %v3465, %v3463
  %v3496 = vpack.c.bf16 %v3469, %v3467
  %v3497 = vpack.c.bf16 %v3473, %v3471
  %v3514 = vunpack.c.l.b16 %v3474
  %v3515 = vunpack.c.l.b16 %v3475
  %v3516 = vunpack.c.l.b16 %v3476
  %v3517 = vunpack.c.l.b16 %v3477
  %v3518 = vunpack.c.l.b16 %v3478
  %v3519 = vunpack.c.l.b16 %v3479
  %v3520 = vunpack.c.l.b16 %v3480
  %v3521 = vunpack.c.l.b16 %v3481
  %v3522 = vunpack.c.l.b16 %v3482
  %v3523 = vunpack.c.l.b16 %v3483
  %v3524 = vunpack.c.l.b16 %v3484
  %v3525 = vunpack.c.l.b16 %v3485
  %v3526 = vunpack.c.l.b16 %v3486
  %v3527 = vunpack.c.l.b16 %v3487
  %v3528 = vunpack.c.l.b16 %v3488
  %v3529 = vunpack.c.l.b16 %v3489
  %v3530 = vpack.c.b16 %v3515, %v3514
  %v3531 = vpack.c.b16 %v3517, %v3516
  %v3532 = vpack.c.b16 %v3519, %v3518
  %v3533 = vpack.c.b16 %v3521, %v3520
  %v3534 = vpack.c.b16 %v3523, %v3522
  %v3535 = vpack.c.b16 %v3525, %v3524
  %v3536 = vpack.c.b16 %v3527, %v3526
  %v3537 = vpack.c.b16 %v3529, %v3528
  %3546 = vmatprep.subr.bf16.mxu0 0
  %3547 = vmatpush1.bf16.msra.mxu0 %v3490
  %3548 = vmatprep.subr.bf16.mxu0 0
  %3549 = vmatpush1.bf16.msra.mxu0 %v3491
  %3550 = vmatprep.subr.bf16.mxu0 0
  %3551 = vmatpush1.bf16.msra.mxu0 %v3492
  %3552 = vmatprep.subr.bf16.mxu0 0
  %3553 = vmatpush1.bf16.msra.mxu0 %v3493
  %3554 = vmatprep.subr.bf16.mxu0 0
  %3555 = vmatpush1.bf16.msra.mxu0 %v3494
  %3556 = vmatprep.subr.bf16.mxu0 0
  %3557 = vmatpush1.bf16.msra.mxu0 %v3495
  %3558 = vmatprep.subr.bf16.mxu0 0
  %3559 = vmatpush1.bf16.msra.mxu0 %v3496
  %3560 = vmatprep.subr.bf16.mxu0 0
  %3561 = vmatpush1.bf16.msra.mxu0 %v3497
  %3562 = vmatprep.subr.bf16.mxu0 0
  %3563 = vmatpush1.bf16.msra.mxu0 0
  %3564 = vmatprep.subr.bf16.mxu0 0
  %3565 = vmatpush1.bf16.msra.mxu0 0
  %3566 = vmatprep.subr.bf16.mxu0 0
  %3567 = vmatpush1.bf16.msra.mxu0 0
  %3568 = vmatprep.subr.bf16.mxu0 0
  %3569 = vmatpush1.bf16.msra.mxu0 0
  %3570 = vmatprep.subr.bf16.mxu0 0
  %3571 = vmatpush1.bf16.msra.mxu0 0
  %3572 = vmatprep.subr.bf16.mxu0 0
  %3573 = vmatpush1.bf16.msra.mxu0 0
  %3574 = vmatprep.subr.bf16.mxu0 0
  %3575 = vmatpush1.bf16.msra.mxu0 0
  %3576 = vmatprep.subr.bf16.mxu0 0
  %3577 = vmatpush1.bf16.msra.mxu0 0
  %3578 = vmatprep.mubr.bf16.mxu0 0
  %3579 = vmatmul.mubr.bf16.gmra.mrb[0].mxu0 %v3530
  %v3580 = vpop.f32.mrb[0].mxu0
  %v3581 = vadd.f32 0.0, %v3580
  %v3582 = vpop.f32.mrb[0].mxu0
  %v3583 = vpop.f32.mrb[0].mxu0
  %v3584 = vpop.f32.mrb[0].mxu0
  %3585 = vmatprep.mubr.bf16.mxu0 0
  %3586 = vmatmul.mubr.bf16.gmra.mrb[0].mxu0 %v3531
  %v3587 = vpop.f32.mrb[0].mxu0
  %v3588 = vpop.f32.mrb[0].mxu0
  %v3589 = vpop.f32.mrb[0].mxu0
  %v3590 = vpop.f32.mrb[0].mxu0
  %3591 = vmatprep.mubr.bf16.mxu0 0
  %3592 = vmatmul.mubr.bf16.gmra.mrb[0].mxu0 %v3532
  %v3593 = vpop.f32.mrb[0].mxu0
  %v3594 = vpop.f32.mrb[0].mxu0
  %v3595 = vpop.f32.mrb[0].mxu0
  %v3596 = vpop.f32.mrb[0].mxu0
  %3597 = vmatprep.mubr.bf16.mxu0 0
  %3598 = vmatmul.mubr.bf16.gmra.mrb[0].mxu0 %v3533
  %v3599 = vpop.f32.mrb[0].mxu0
  %v3600 = vpop.f32.mrb[0].mxu0
  %v3601 = vpop.f32.mrb[0].mxu0
  %v3602 = vpop.f32.mrb[0].mxu0
  %3603 = vmatprep.mubr.bf16.mxu0 0
  %3604 = vmatmul.mubr.bf16.gmra.mrb[0].mxu0 %v3534
  %v3605 = vpop.f32.mrb[0].mxu0
  %v3606 = vpop.f32.mrb[0].mxu0
  %v3607 = vpop.f32.mrb[0].mxu0
  %v3608 = vpop.f32.mrb[0].mxu0
  %3609 = vmatprep.mubr.bf16.mxu0 0
  %3610 = vmatmul.mubr.bf16.gmra.mrb[0].mxu0 %v3535
  %v3611 = vpop.f32.mrb[0].mxu0
  %v3612 = vpop.f32.mrb[0].mxu0
  %v3613 = vpop.f32.mrb[0].mxu0
  %v3614 = vpop.f32.mrb[0].mxu0
  %3615 = vmatprep.mubr.bf16.mxu0 0
  %3616 = vmatmul.mubr.bf16.gmra.mrb[0].mxu0 %v3536
  %v3617 = vpop.f32.mrb[0].mxu0
  %v3618 = vpop.f32.mrb[0].mxu0
  %v3619 = vpop.f32.mrb[0].mxu0
  %v3620 = vpop.f32.mrb[0].mxu0
  %3621 = vmatprep.mubr.bf16.mxu0 0
  %3622 = vmatmul.mubr.bf16.gmra.mrb[0].mxu0 %v3537
  %v3623 = vpop.f32.mrb[0].mxu0
  %v3624 = vpop.f32.mrb[0].mxu0
  %v3625 = vpop.f32.mrb[0].mxu0
  %v3626 = vpop.f32.mrb[0].mxu0
  %3627 = vdwg.mxu0
  %v3628 = vld [vmem:[%s6] sm:$0xff]
  %3630 = vset.pattern.permute.xlu0 0
  %3631 = vperm.xlu0 %3630, %v3628
  %v3632 = vpop.permute.xlu0 %3631
  %v3634 = vadd.f32 %v3581, %v3632
  %3635 = vst [vmem:[%s7] sm:$0xff] %v3634
  // Predicated region
  $region30: #{classifier_forward.1} parent=0 // pred_check
    _
  $region31: #{classifier_forward.1} parent=0 // pred_check_branch
    %3637 = sbr.rel (0) target = $region33
  $region32: #{classifier_forward.1} parent=0 // pred_region
    _
  $region33: #{classifier_forward.1} parent=0 // pred_fallthru
    _
  // Predicated region
  $region34: #{classifier_forward.1} parent=0 // pred_check
    _
  $region35: #{classifier_forward.1} parent=0 // pred_check_branch
    %3639 = sbr.rel (0) target = $region37
  $region36: #{classifier_forward.1} parent=0 // pred_region
    _
  $region37: #{classifier_forward.1} parent=0 // pred_fallthru
    _

</llo_original>
